<compile_context>
chip_gen: v5e
topology: v5e:2x2
jax: 0.10.0
libtpu: 0.0.40
codegen_flags: <defaults>
</compile_context>

<pallas_src>
import math
from functools import partial

import jax
import jax.numpy as jnp
from jax import lax
from jax.experimental import pallas as pl
from jax.experimental.pallas import tpu as pltpu

# ----------------------------- configuration -----------------------------
NHID = 32
NUM_CONVS = 2
NUM_HEADS = 2
NUM_CLASSES = 4
POOLING_RATIO = 0.25
AVG_NUM_NODES = 16
MODEL_SEQUENCE = ["GMPool_I", "SelfAtt", "GMPool_I"]   # args.model_string
K0 = math.ceil(POOLING_RATIO * AVG_NUM_NODES)          # seeds of first PMA = 4
ATOM_DIMS = [119, 4, 12, 12, 10, 6, 6, 2, 2]           # OGB atom feature vocab sizes
BOND_DIMS = [5, 6, 2]                                  # OGB bond feature vocab sizes
LANE = 128
NEG_INF = -1e9


def _vmem_limit_bytes():
    """Per-generation scoped-VMEM request (half of physical, capped at 64 MiB)."""
    try:
        cap = int(pltpu.get_tpu_info().vmem_capacity_bytes)
    except Exception:
        cap = 128 * 1024 * 1024
    return int(min(cap // 2, 64 * 1024 * 1024))


_VMEM_LIMIT = _vmem_limit_bytes()

# ----------------------------- Pallas kernels -----------------------------


def _gcn_fused_kernel(x_ref, row_ref, col_ref, norm_ref, invdeg_ref,
                      w_ref, b_ref, e_ref, r_ref, o_ref):
    """Both GCNConv_for_OGB layers fused; writes lane-dense concat([h1, h2], 0-pad) bf16."""
    num_convs = w_ref.shape[0]
    nhid = w_ref.shape[2]
    n_pad = x_ref.shape[0]
    n_edge = norm_ref.shape[0]

    x = x_ref[...].astype(jnp.bfloat16)          # [NP, nhid]
    rows = row_ref[...]                          # [E, 1] int32 (source node per edge)
    cols = col_ref[...]                          # [1, E] int32 (target node per edge)
    norm = norm_ref[...]                         # [E, 1] f32
    invdeg = invdeg_ref[...]                     # [NP, 1] f32

    # Gather/scatter one-hots built in-kernel from the index vectors (bf16 -> MXU native,
    # no O(E*N) HBM traffic, no host-side transpose).
    # TODO(synk): replace with a DMA row-gather + tiled segment-sum over an E grid axis
    # before scaling to real OGB batches (this path is still O(E*N) VMEM/FLOPs).
    src_oh = jnp.where(
        lax.broadcasted_iota(jnp.int32, (n_edge, n_pad), 1) == rows, 1.0, 0.0
    ).astype(jnp.bfloat16)                       # [E, NP]  src_oh[e, n] = (row[e] == n)
    dst_ohT = jnp.where(
        lax.broadcasted_iota(jnp.int32, (n_pad, n_edge), 0) == cols, 1.0, 0.0
    ).astype(jnp.bfloat16)                       # [NP, E]  dst_ohT[n, e] = (col[e] == n)

    outs = []
    for c in range(num_convs):                   # static unroll (NUM_CONVS = 2)
        xl = jnp.dot(x, w_ref[c], preferred_element_type=jnp.float32) + b_ref[c]
        x_src = jnp.dot(src_oh, xl.astype(jnp.bfloat16),
                        preferred_element_type=jnp.float32)          # gather x_lin[row]
        msg = norm * jnp.maximum(x_src + e_ref[c], 0.0)
        agg = jnp.dot(dst_ohT, msg.astype(jnp.bfloat16),
                      preferred_element_type=jnp.float32)            # scatter-add at col
        xf = jnp.maximum(agg + jnp.maximum(xl + r_ref[c], 0.0) * invdeg, 0.0)
        outs.append(xf)
        x = xf.astype(jnp.bfloat16)
    pad_w = o_ref.shape[1] - num_convs * nhid
    if pad_w > 0:
        outs.append(jnp.zeros((n_pad, pad_w), jnp.float32))
    o_ref[...] = jnp.concatenate(outs, axis=-1).astype(o_ref.dtype)  # lane-dense [NP, 128]


def gcn_convs_fused(x, rows2d, cols2d, norm, inv_deg,
                    w_stack, b_stack, e_stack, r_stack):
    n_pad = int(x.shape[0])
    n_edge = int(norm.shape[0])
    c = int(w_stack.shape[0])
    d = int(w_stack.shape[2])
    flops = 2 * c * (n_pad * d * d + 2 * n_edge * n_pad * d) + 8 * c * n_pad * d
    bytes_accessed = (4 * (n_pad * d + 3 * n_edge + n_pad)
                      + 2 * c * d * d + 4 * c * 2 * d + 4 * c * n_edge * d
                      + 2 * n_pad * LANE)
    return pl.pallas_call(
        _gcn_fused_kernel,
        out_shape=jax.ShapeDtypeStruct((n_pad, LANE), jnp.bfloat16),
        compiler_params=pltpu.CompilerParams(vmem_limit_bytes=_VMEM_LIMIT),
        cost_estimate=pl.CostEstimate(flops=int(flops), transcendentals=0,
                                      bytes_accessed=int(bytes_accessed)),
    )(x, rows2d, cols2d, norm, inv_deg, w_stack, b_stack, e_stack, r_stack)


def _mh_attn(Qp, Kp, Vp, add_mask, num_heads):
    """MAB attention core: softmax over keys, dim_V scale pre-folded into K, residual = Qp."""
    dv = Qp.shape[1]
    dh = dv // num_heads
    heads = []
    for h in range(num_heads):                   # static unroll (NUM_HEADS = 2)
        qh = Qp[:, h * dh:(h + 1) * dh]
        kh = Kp[:, h * dh:(h + 1) * dh].astype(jnp.bfloat16)
        vh = Vp[:, h * dh:(h + 1) * dh].astype(jnp.bfloat16)
        sc = lax.dot_general(qh.astype(jnp.bfloat16), kh, (((1,), (1,)), ((), ())),
                             preferred_element_type=jnp.float32)
        if add_mask is not None:
            sc = sc + add_mask                   # additive -1e9 mask over keys
        m = jnp.max(sc, axis=-1, keepdims=True)
        e = jnp.exp(sc - m)
        inv = pl.reciprocal(jnp.sum(e, axis=-1, keepdims=True), approx=True)
        a = (e * inv).astype(jnp.bfloat16)       # softmax over keys
        heads.append(qh + jnp.dot(a, vh, preferred_element_type=jnp.float32))
    return jnp.concatenate(heads, axis=-1)


def _tail_kernel(x_ref, mask_ref, sabm_ref, seedm_ref,
                 s0_ref, wq0_ref, bq0_ref, wkv0_ref, bkv0_ref, wo0_ref, bo0_ref,
                 wq1_ref, bq1_ref, wkv1_ref, bkv1_ref, wo1_ref, bo1_ref,
                 s2_ref, wq2_ref, bq2_ref, wkv2_ref, bkv2_ref, wo2_ref, bo2_ref,
                 wp_ref, bp_ref, w1_ref, b1_ref, w2_ref, b2_ref, w3_ref, b3_ref,
                 o_ref, *, num_heads):
    """Entire pooling (PMA -> SAB -> PMA -> Linear) + classifier, VMEM-resident & batched."""
    f32 = jnp.float32
    bf16 = jnp.bfloat16
    B, M = mask_ref.shape
    dv0 = wq0_ref.shape[1]
    dv1 = wq1_ref.shape[1]
    dv2 = wq2_ref.shape[1]

    X = x_ref[...]                               # [B*M, 128] bf16 lane-dense x_cat
    mask_add = mask_ref[...]                     # [B, M]       additive key mask (pool 0)
    sab_mask = sabm_ref[...]                     # [B*K0, B*K0] block-diag mask  (SAB)
    seed_mask = seedm_ref[...]                   # [B, B*K0]    block mask       (pool 2)

    # Shared seed-query projections (identical for every graph) + batched fused K/V
    # projection of pool-0 over the whole flattened node batch (K = 128 contraction).
    Qp0 = jnp.dot(s0_ref[...], wq0_ref[...], preferred_element_type=f32) + bq0_ref[...]
    Qp2 = jnp.dot(s2_ref[...], wq2_ref[...], preferred_element_type=f32) + bq2_ref[...]
    KV0 = jnp.dot(X, wkv0_ref[...], preferred_element_type=f32) + bkv0_ref[...]   # [B*M, 2*dv0]

    # ---- pool 0: GMPool_I (PMA over nodes, masked) — only softmax+AV per graph ----
    h0_parts = []
    for b in range(B):                           # static unroll; B kept small here.
        kv = KV0[b * M:(b + 1) * M, :]           # aligned sublane slice (M % 8 == 0)
        h0_parts.append(_mh_attn(Qp0, kv[:, :dv0], kv[:, dv0:],
                                 mask_add[b:b + 1, :], num_heads))
    H0 = jnp.concatenate(h0_parts, axis=0)       # [B*K0, dv0]
    H0 = H0 + jnp.maximum(
        jnp.dot(H0.astype(bf16), wo0_ref[...], preferred_element_type=f32) + bo0_ref[...], 0.0)

    # ---- pool 1: SelfAtt (SAB) as ONE block-diagonal attention over all graphs ----
    H0b = H0.astype(bf16)
    QP1 = jnp.dot(H0b, wq1_ref[...], preferred_element_type=f32) + bq1_ref[...]
    KV1 = jnp.dot(H0b, wkv1_ref[...], preferred_element_type=f32) + bkv1_ref[...]
    H1 = _mh_attn(QP1, KV1[:, :dv1], KV1[:, dv1:], sab_mask, num_heads)
    H1 = H1 + jnp.maximum(
        jnp.dot(H1.astype(bf16), wo1_ref[...], preferred_element_type=f32) + bo1_ref[...], 0.0)

    # ---- pool 2: GMPool_I (one seed per graph), batched block attention ----
    KV2 = jnp.dot(H1.astype(bf16), wkv2_ref[...], preferred_element_type=f32) + bkv2_ref[...]
    Q2 = jnp.broadcast_to(Qp2, (B, dv2))         # shared seed query, one row per graph
    H2 = _mh_attn(Q2, KV2[:, :dv2], KV2[:, dv2:], seed_mask, num_heads)
    H2 = H2 + jnp.maximum(
        jnp.dot(H2.astype(bf16), wo2_ref[...], preferred_element_type=f32) + bo2_ref[...], 0.0)

    # ---- pool 3: Linear(NHID, NHID) + classifier (Dropout = eval-mode identity) ----
    Z = jnp.dot(H2.astype(bf16), wp_ref[...], preferred_element_type=f32) + bp_ref[...]
    Z = jnp.maximum(jnp.dot(Z.astype(bf16), w1_ref[...], preferred_element_type=f32) + b1_ref[...], 0.0)
    Z = jnp.maximum(jnp.dot(Z.astype(bf16), w2_ref[...], preferred_element_type=f32) + b2_ref[...], 0.0)
    # last classifier weight is zero-padded to 128 output lanes -> lane-dense store
    o_ref[...] = jnp.dot(Z.astype(bf16), w3_ref[...], preferred_element_type=f32) + b3_ref[...]
    # TODO(synk): for large B, turn the graph dimension into a "parallel" grid axis
    # (groups of ~8 graphs per step) to use both TensorCores on v7x.


def tail_fused(x_cat, mask_add, sab_mask, seed_mask, tail_params, num_heads):
    B, M = int(mask_add.shape[0]), int(mask_add.shape[1])
    bm = int(x_cat.shape[0])
    k0 = int(tail_params[0].shape[0])
    dv0 = int(tail_params[1].shape[1])
    param_bytes = sum(int(t.size) * t.dtype.itemsize for t in tail_params)
    flops = 2 * (bm * LANE * 2 * dv0
                 + num_heads * B * k0 * M * dv0 * 2
                 + B * k0 * (dv0 * dv0 + 3 * dv0 * NHID + 4 * NHID * NHID)
                 + B * NHID * (2 * NHID + NHID // 2 + LANE))
    transcendentals = num_heads * (B * k0 * M + (B * k0) ** 2 + B * B * k0)
    bytes_accessed = (int(x_cat.size) * x_cat.dtype.itemsize
                      + 4 * (B * M + (B * k0) ** 2 + B * B * k0)
                      + param_bytes + 4 * B * LANE)
    return pl.pallas_call(
        partial(_tail_kernel, num_heads=num_heads),
        out_shape=jax.ShapeDtypeStruct((B, LANE), jnp.float32),
        compiler_params=pltpu.CompilerParams(vmem_limit_bytes=_VMEM_LIMIT),
        cost_estimate=pl.CostEstimate(flops=int(flops), transcendentals=int(transcendentals),
                                      bytes_accessed=int(bytes_accessed)),
    )(x_cat, mask_add, sab_mask, seed_mask, *tail_params)


# ----------------------------- parameters -----------------------------

def make_params():
    key = jax.random.PRNGKey(0)
    keys = iter(jax.random.split(key, 512))
    nxt = lambda: next(keys)

    def dense(din, dout):
        w = jax.random.normal(nxt(), (din, dout), jnp.float32) * (1.0 / math.sqrt(din))
        b = jax.random.normal(nxt(), (1, dout), jnp.float32) * 0.01
        return w, b

    def emb(n, d):
        return jax.random.normal(nxt(), (n, d), jnp.float32) * 0.1

    p = {}
    p["atom_emb"] = [emb(n, NHID) for n in ATOM_DIMS]

    p["convs"] = []
    for _ in range(NUM_CONVS):
        p["convs"].append({
            "lin": dense(NHID, NHID),
            "root": jax.random.normal(nxt(), (1, NHID), jnp.float32) * 0.1,
            "bond_emb": [emb(n, NHID) for n in BOND_DIMS],
        })

    def mab_params(dq, dk, dv):
        return (dense(dq, dv), dense(dk, dv), dense(dk, dv), dense(dv, dv))

    d_cat = NHID * NUM_CONVS
    p["S0"] = jax.random.normal(nxt(), (1, K0, d_cat), jnp.float32) * 0.1
    p["mab0"] = mab_params(d_cat, d_cat, d_cat)          # GMPool_I (PMA)
    p["mab1"] = mab_params(d_cat, d_cat, NHID)           # SelfAtt (SAB)
    p["S2"] = jax.random.normal(nxt(), (1, 1, NHID), jnp.float32) * 0.1
    p["mab2"] = mab_params(NHID, NHID, NHID)             # GMPool_I, 1 seed
    p["pool_lin"] = dense(NHID, NHID)
    p["cls1"] = dense(NHID, NHID)
    p["cls2"] = dense(NHID, NHID // 2)
    p["cls3"] = dense(NHID // 2, NUM_CLASSES)
    return p


def prep_tail_params(p):
    """Fold 1/sqrt(dim_V) into W_k, fuse K/V weights, bf16-cast MXU weights,
    zero-pad wkv0 rows to 128 (lane-dense x_cat) and the last classifier to 128 lanes."""
    bf16 = jnp.bfloat16

    def fuse(mab_p, pad_rows=None):
        (wq, bq), (wk, bk), (wv, bv), (wo, bo) = mab_p
        dv = wq.shape[1]
        s = 1.0 / math.sqrt(dv)                  # 1/sqrt(dim_V) as in GMT (NOT 1/sqrt(d_head))
        wkv = jnp.concatenate([wk * s, wv], axis=1)
        bkv = jnp.concatenate([bk * s, bv], axis=1)
        if pad_rows is not None and wkv.shape[0] < pad_rows:
            wkv = jnp.zeros((pad_rows, wkv.shape[1]), jnp.float32).at[:wkv.shape[0]].set(wkv)
        return (wq.astype(bf16), bq, wkv.astype(bf16), bkv, wo.astype(bf16), bo)

    wq0, bq0, wkv0, bkv0, wo0, bo0 = fuse(p["mab0"], pad_rows=LANE)
    wq1, bq1, wkv1, bkv1, wo1, bo1 = fuse(p["mab1"])
    wq2, bq2, wkv2, bkv2, wo2, bo2 = fuse(p["mab2"])
    wp, bp = p["pool_lin"]
    w1, b1 = p["cls1"]
    w2, b2 = p["cls2"]
    w3, b3 = p["cls3"]
    w3p = jnp.zeros((w3.shape[0], LANE), jnp.float32).at[:, :w3.shape[1]].set(w3)
    b3p = jnp.zeros((1, LANE), jnp.float32).at[:, :b3.shape[1]].set(b3)
    s0 = p["S0"][0].astype(bf16)                 # [K0, d_cat]
    s2 = p["S2"][0].astype(bf16)                 # [1, NHID]
    return (s0, wq0, bq0, wkv0, bkv0, wo0, bo0,
            wq1, bq1, wkv1, bkv1, wo1, bo1,
            s2, wq2, bq2, wkv2, bkv2, wo2, bo2,
            wp.astype(bf16), bp, w1.astype(bf16), b1, w2.astype(bf16), b2,
            w3p.astype(bf16), b3p)


# ----------------------------- forward -----------------------------

def _forward_impl(params, x_atoms, edge_index, edge_attr, batch, counts):
    counts = tuple(int(c) for c in counts)
    N = x_atoms.shape[0]
    E = edge_index.shape[1]
    B = len(counts)
    M = ((max(counts) + 7) // 8) * 8             # dense-batch slots per graph (mult of 8)
    NP = B * M
    row, col = edge_index[0], edge_index[1]

    # AtomEncoder (embedding gathers — JAX glue)
    h = jnp.zeros((N, NHID), jnp.float32)
    for k, tbl in enumerate(params["atom_emb"]):
        h = h + tbl[x_atoms[:, k]]

    # Dense-batch node layout built up-front (node i of graph b, slot pos -> row b*M+pos);
    # removes the to_dense_batch scatter between the two kernels.  `batch` is assumed
    # sorted / contiguous per graph (as in the PyTorch loader).
    offsets = jnp.asarray([sum(counts[:b]) for b in range(B)], jnp.int32)
    node_map = batch.astype(jnp.int32) * M + (jnp.arange(N, dtype=jnp.int32) - offsets[batch])
    h_pad = jnp.zeros((NP, NHID), jnp.float32).at[node_map].set(h)
    row_p = node_map[row]
    col_p = node_map[col]

    # graph-structure helpers built ONCE (loop-invariant across conv layers)
    deg = jnp.zeros((NP,), jnp.float32).at[row_p].add(1.0) + 1.0
    dis = deg ** -0.5
    norm = (dis[row_p] * dis[col_p]).reshape(E, 1)
    inv_deg = (1.0 / deg).reshape(NP, 1)
    rows2d = row_p.reshape(E, 1).astype(jnp.int32)
    cols2d = col_p.reshape(1, E).astype(jnp.int32)

    # stacked per-layer conv params + bond-encoder embeddings (JAX gathers)
    w_stack = jnp.stack([l["lin"][0] for l in params["convs"]]).astype(jnp.bfloat16)
    b_stack = jnp.stack([l["lin"][1] for l in params["convs"]])
    r_stack = jnp.stack([l["root"] for l in params["convs"]])
    e_list = []
    for l in params["convs"]:
        ee = jnp.zeros((E, NHID), jnp.float32)
        for k, tbl in enumerate(l["bond_emb"]):
            ee = ee + tbl[edge_attr[:, k]]
        e_list.append(ee)
    e_stack = jnp.stack(e_list)                  # [C, E, NHID]

    # fused GCN convs -> lane-dense x_cat [B*M, 128] (bf16), already in dense-batch layout
    x_cat = gcn_convs_fused(h_pad, rows2d, cols2d, norm, inv_deg,
                            w_stack, b_stack, e_stack, r_stack)

    # tiny additive masks (host-built constants)
    cnt = jnp.asarray(counts, jnp.int32)
    pos = jnp.arange(M, dtype=jnp.int32)
    mask_add = jnp.where(pos[None, :] < cnt[:, None], 0.0, NEG_INF).astype(jnp.float32)   # [B, M]
    gk = jnp.arange(B * K0, dtype=jnp.int32) // K0
    sab_mask = jnp.where(gk[:, None] == gk[None, :], 0.0, NEG_INF).astype(jnp.float32)    # [B*K0, B*K0]
    seed_mask = jnp.where(jnp.arange(B, dtype=jnp.int32)[:, None] == gk[None, :],
                          0.0, NEG_INF).astype(jnp.float32)                               # [B, B*K0]

    # fused pooling + classifier tail (single kernel); logits come back lane-dense padded
    logits_pad = tail_fused(x_cat, mask_add, sab_mask, seed_mask,
                            prep_tail_params(params), NUM_HEADS)
    return logits_pad[:, :NUM_CLASSES]           # OGB variant returns logits (no log_softmax)
    # TODO(synk): dropout treated as eval-mode identity; training-mode RNG dropout not implemented.


forward = jax.jit(_forward_impl, static_argnums=(5,))


# ----------------------------- main -----------------------------

if __name__ == "__main__":
    key = jax.random.PRNGKey(0)
    k_atoms, k_bonds = jax.random.split(key)

    # Two graphs: 10-node ring and 6-node ring (both edge directions present).
    counts = (10, 6)
    N = sum(counts)
    batch = jnp.asarray([0] * 10 + [1] * 6, jnp.int32)

    edges = []
    for i in range(10):
        edges.append((i, (i + 1) % 10)); edges.append(((i + 1) % 10, i))
    for i in range(6):
        edges.append((10 + i, 10 + (i + 1) % 6)); edges.append((10 + (i + 1) % 6, 10 + i))
    edge_index = jnp.asarray(edges, jnp.int32).T                   # [2, E]
    E = edge_index.shape[1]

    atom_keys = jax.random.split(k_atoms, len(ATOM_DIMS))
    x_atoms = jnp.stack(
        [jax.random.randint(atom_keys[i], (N,), 0, d) for i, d in enumerate(ATOM_DIMS)],
        axis=1).astype(jnp.int32)                                  # [N, 9]
    bond_keys = jax.random.split(k_bonds, len(BOND_DIMS))
    edge_attr = jnp.stack(
        [jax.random.randint(bond_keys[i], (E,), 0, d) for i, d in enumerate(BOND_DIMS)],
        axis=1).astype(jnp.int32)                                  # [E, 3]

    params = make_params()
    out = forward(params, x_atoms, edge_index, edge_attr, batch, counts)
    out = jax.block_until_ready(out)
    assert out.shape == (len(counts), NUM_CLASSES)
    assert bool(jnp.all(jnp.isfinite(out)))
    print("KERNEL_OK")
</pallas_src>

<mosaic_0001>
module attributes {stable_mosaic.version = 11 : i64} {
  func.func @_gcn_fused_kernel(%arg0: memref<32x32xf32, #tpu.memory_space<vmem>>, %arg1: memref<32x1xi32, #tpu.memory_space<vmem>>, %arg2: memref<1x32xi32, #tpu.memory_space<vmem>>, %arg3: memref<32x1xf32, #tpu.memory_space<vmem>>, %arg4: memref<32x1xf32, #tpu.memory_space<vmem>>, %arg5: memref<2x32x32xbf16, #tpu.memory_space<vmem>>, %arg6: memref<2x1x32xf32, #tpu.memory_space<vmem>>, %arg7: memref<2x32x32xf32, #tpu.memory_space<vmem>>, %arg8: memref<2x1x32xf32, #tpu.memory_space<vmem>>, %arg9: memref<32x128xbf16, #tpu.memory_space<vmem>>) attributes {dimension_semantics = [], scalar_prefetch = 0 : i64, scratch_operands = 0 : i64, tpu.core_type = #tpu.core_type<tc>} {
    %c0 = arith.constant 0 : index
    %c0_0 = arith.constant 0 : index
    %0 = vector.load %arg0[%c0, %c0_0] : memref<32x32xf32, #tpu.memory_space<vmem>>, vector<32x32xf32>
    %1 = arith.truncf %0 : vector<32x32xf32> to vector<32x32xbf16>
    %c0_1 = arith.constant 0 : index
    %c0_2 = arith.constant 0 : index
    %2 = vector.load %arg1[%c0_1, %c0_2] : memref<32x1xi32, #tpu.memory_space<vmem>>, vector<32x1xi32>
    %c0_3 = arith.constant 0 : index
    %c0_4 = arith.constant 0 : index
    %3 = vector.load %arg2[%c0_3, %c0_4] : memref<1x32xi32, #tpu.memory_space<vmem>>, vector<1x32xi32>
    %c0_5 = arith.constant 0 : index
    %c0_6 = arith.constant 0 : index
    %4 = vector.load %arg3[%c0_5, %c0_6] : memref<32x1xf32, #tpu.memory_space<vmem>>, vector<32x1xf32>
    %c0_7 = arith.constant 0 : index
    %c0_8 = arith.constant 0 : index
    %5 = vector.load %arg4[%c0_7, %c0_8] : memref<32x1xf32, #tpu.memory_space<vmem>>, vector<32x1xf32>
    %6 = tpu.iota {dimensions = array<i32: 1>} : vector<32x32xi32>
    %7 = vector.broadcast %2 : vector<32x1xi32> to vector<32x32xi32>
    %8 = arith.cmpi eq, %6, %7 : vector<32x32xi32>
    %cst = arith.constant 1.000000e+00 : f32
    %cst_9 = arith.constant 0.000000e+00 : f32
    %9 = vector.broadcast %cst : f32 to vector<32x32xf32>
    %10 = vector.broadcast %cst_9 : f32 to vector<32x32xf32>
    %11 = arith.select %8, %9, %10 : vector<32x32xi1>, vector<32x32xf32>
    %12 = arith.truncf %11 : vector<32x32xf32> to vector<32x32xbf16>
    %13 = tpu.iota {dimensions = array<i32: 0>} : vector<32x32xi32>
    %14 = vector.broadcast %3 : vector<1x32xi32> to vector<32x32xi32>
    %15 = arith.cmpi eq, %13, %14 : vector<32x32xi32>
    %cst_10 = arith.constant 1.000000e+00 : f32
    %cst_11 = arith.constant 0.000000e+00 : f32
    %16 = vector.broadcast %cst_10 : f32 to vector<32x32xf32>
    %17 = vector.broadcast %cst_11 : f32 to vector<32x32xf32>
    %18 = arith.select %15, %16, %17 : vector<32x32xi1>, vector<32x32xf32>
    %19 = arith.truncf %18 : vector<32x32xf32> to vector<32x32xbf16>
    %c0_12 = arith.constant 0 : index
    %c0_13 = arith.constant 0 : index
    %c0_14 = arith.constant 0 : index
    %20 = vector.load %arg5[%c0_12, %c0_13, %c0_14] : memref<2x32x32xbf16, #tpu.memory_space<vmem>>, vector<1x32x32xbf16>
    %21 = vector.shape_cast %20 : vector<1x32x32xbf16> to vector<32x32xbf16>
    %cst_15 = arith.constant dense<0.000000e+00> : vector<32x32xf32>
    %22 = tpu.matmul %1, %21, %cst_15 {dimension_numbers = #tpu.dot_dimension_numbers<[1], [0], [0], [1], [0, 0, 1, 1], [], []>} : vector<32x32xbf16>, vector<32x32xbf16>, vector<32x32xf32> -> vector<32x32xf32>
    %c0_16 = arith.constant 0 : index
    %c0_17 = arith.constant 0 : index
    %c0_18 = arith.constant 0 : index
    %23 = vector.load %arg6[%c0_16, %c0_17, %c0_18] : memref<2x1x32xf32, #tpu.memory_space<vmem>>, vector<1x1x32xf32>
    %24 = vector.shape_cast %23 : vector<1x1x32xf32> to vector<1x32xf32>
    %25 = vector.broadcast %24 : vector<1x32xf32> to vector<32x32xf32>
    %26 = arith.addf %22, %25 : vector<32x32xf32>
    %27 = arith.truncf %26 : vector<32x32xf32> to vector<32x32xbf16>
    %cst_19 = arith.constant dense<0.000000e+00> : vector<32x32xf32>
    %28 = tpu.matmul %12, %27, %cst_19 {dimension_numbers = #tpu.dot_dimension_numbers<[1], [0], [0], [1], [0, 0, 1, 1], [], []>} : vector<32x32xbf16>, vector<32x32xbf16>, vector<32x32xf32> -> vector<32x32xf32>
    %c0_20 = arith.constant 0 : index
    %c0_21 = arith.constant 0 : index
    %c0_22 = arith.constant 0 : index
    %29 = vector.load %arg7[%c0_20, %c0_21, %c0_22] : memref<2x32x32xf32, #tpu.memory_space<vmem>>, vector<1x32x32xf32>
    %30 = vector.shape_cast %29 : vector<1x32x32xf32> to vector<32x32xf32>
    %31 = arith.addf %28, %30 : vector<32x32xf32>
    %cst_23 = arith.constant 0.000000e+00 : f32
    %32 = vector.broadcast %cst_23 : f32 to vector<32x32xf32>
    %33 = arith.maximumf %31, %32 : vector<32x32xf32>
    %34 = vector.broadcast %4 : vector<32x1xf32> to vector<32x32xf32>
    %35 = arith.mulf %34, %33 : vector<32x32xf32>
    %36 = arith.truncf %35 : vector<32x32xf32> to vector<32x32xbf16>
    %cst_24 = arith.constant dense<0.000000e+00> : vector<32x32xf32>
    %37 = tpu.matmul %19, %36, %cst_24 {dimension_numbers = #tpu.dot_dimension_numbers<[1], [0], [0], [1], [0, 0, 1, 1], [], []>} : vector<32x32xbf16>, vector<32x32xbf16>, vector<32x32xf32> -> vector<32x32xf32>
    %c0_25 = arith.constant 0 : index
    %c0_26 = arith.constant 0 : index
    %c0_27 = arith.constant 0 : index
    %38 = vector.load %arg8[%c0_25, %c0_26, %c0_27] : memref<2x1x32xf32, #tpu.memory_space<vmem>>, vector<1x1x32xf32>
    %39 = vector.shape_cast %38 : vector<1x1x32xf32> to vector<1x32xf32>
    %40 = vector.broadcast %39 : vector<1x32xf32> to vector<32x32xf32>
    %41 = arith.addf %26, %40 : vector<32x32xf32>
    %cst_28 = arith.constant 0.000000e+00 : f32
    %42 = vector.broadcast %cst_28 : f32 to vector<32x32xf32>
    %43 = arith.maximumf %41, %42 : vector<32x32xf32>
    %44 = vector.broadcast %5 : vector<32x1xf32> to vector<32x32xf32>
    %45 = arith.mulf %43, %44 : vector<32x32xf32>
    %46 = arith.addf %37, %45 : vector<32x32xf32>
    %cst_29 = arith.constant 0.000000e+00 : f32
    %47 = vector.broadcast %cst_29 : f32 to vector<32x32xf32>
    %48 = arith.maximumf %46, %47 : vector<32x32xf32>
    %49 = arith.truncf %48 : vector<32x32xf32> to vector<32x32xbf16>
    %c1 = arith.constant 1 : index
    %c0_30 = arith.constant 0 : index
    %c0_31 = arith.constant 0 : index
    %50 = vector.load %arg5[%c1, %c0_30, %c0_31] : memref<2x32x32xbf16, #tpu.memory_space<vmem>>, vector<1x32x32xbf16>
    %51 = vector.shape_cast %50 : vector<1x32x32xbf16> to vector<32x32xbf16>
    %cst_32 = arith.constant dense<0.000000e+00> : vector<32x32xf32>
    %52 = tpu.matmul %49, %51, %cst_32 {dimension_numbers = #tpu.dot_dimension_numbers<[1], [0], [0], [1], [0, 0, 1, 1], [], []>} : vector<32x32xbf16>, vector<32x32xbf16>, vector<32x32xf32> -> vector<32x32xf32>
    %c1_33 = arith.constant 1 : index
    %c0_34 = arith.constant 0 : index
    %c0_35 = arith.constant 0 : index
    %53 = vector.load %arg6[%c1_33, %c0_34, %c0_35] : memref<2x1x32xf32, #tpu.memory_space<vmem>>, vector<1x1x32xf32>
    %54 = vector.shape_cast %53 : vector<1x1x32xf32> to vector<1x32xf32>
    %55 = vector.broadcast %54 : vector<1x32xf32> to vector<32x32xf32>
    %56 = arith.addf %52, %55 : vector<32x32xf32>
    %57 = arith.truncf %56 : vector<32x32xf32> to vector<32x32xbf16>
    %cst_36 = arith.constant dense<0.000000e+00> : vector<32x32xf32>
    %58 = tpu.matmul %12, %57, %cst_36 {dimension_numbers = #tpu.dot_dimension_numbers<[1], [0], [0], [1], [0, 0, 1, 1], [], []>} : vector<32x32xbf16>, vector<32x32xbf16>, vector<32x32xf32> -> vector<32x32xf32>
    %c1_37 = arith.constant 1 : index
    %c0_38 = arith.constant 0 : index
    %c0_39 = arith.constant 0 : index
    %59 = vector.load %arg7[%c1_37, %c0_38, %c0_39] : memref<2x32x32xf32, #tpu.memory_space<vmem>>, vector<1x32x32xf32>
    %60 = vector.shape_cast %59 : vector<1x32x32xf32> to vector<32x32xf32>
    %61 = arith.addf %58, %60 : vector<32x32xf32>
    %cst_40 = arith.constant 0.000000e+00 : f32
    %62 = vector.broadcast %cst_40 : f32 to vector<32x32xf32>
    %63 = arith.maximumf %61, %62 : vector<32x32xf32>
    %64 = vector.broadcast %4 : vector<32x1xf32> to vector<32x32xf32>
    %65 = arith.mulf %64, %63 : vector<32x32xf32>
    %66 = arith.truncf %65 : vector<32x32xf32> to vector<32x32xbf16>
    %cst_41 = arith.constant dense<0.000000e+00> : vector<32x32xf32>
    %67 = tpu.matmul %19, %66, %cst_41 {dimension_numbers = #tpu.dot_dimension_numbers<[1], [0], [0], [1], [0, 0, 1, 1], [], []>} : vector<32x32xbf16>, vector<32x32xbf16>, vector<32x32xf32> -> vector<32x32xf32>
    %c1_42 = arith.constant 1 : index
    %c0_43 = arith.constant 0 : index
    %c0_44 = arith.constant 0 : index
    %68 = vector.load %arg8[%c1_42, %c0_43, %c0_44] : memref<2x1x32xf32, #tpu.memory_space<vmem>>, vector<1x1x32xf32>
    %69 = vector.shape_cast %68 : vector<1x1x32xf32> to vector<1x32xf32>
    %70 = vector.broadcast %69 : vector<1x32xf32> to vector<32x32xf32>
    %71 = arith.addf %56, %70 : vector<32x32xf32>
    %cst_45 = arith.constant 0.000000e+00 : f32
    %72 = vector.broadcast %cst_45 : f32 to vector<32x32xf32>
    %73 = arith.maximumf %71, %72 : vector<32x32xf32>
    %74 = vector.broadcast %5 : vector<32x1xf32> to vector<32x32xf32>
    %75 = arith.mulf %73, %74 : vector<32x32xf32>
    %76 = arith.addf %67, %75 : vector<32x32xf32>
    %cst_46 = arith.constant 0.000000e+00 : f32
    %77 = vector.broadcast %cst_46 : f32 to vector<32x32xf32>
    %78 = arith.maximumf %76, %77 : vector<32x32xf32>
    %cst_47 = arith.constant 0.000000e+00 : f32
    %79 = vector.broadcast %cst_47 : f32 to vector<32x64xf32>
    %80 = tpu.concatenate %48, %78, %79 in 1 : vector<32x32xf32>, vector<32x32xf32>, vector<32x64xf32> -> vector<32x128xf32>
    %81 = arith.truncf %80 : vector<32x128xf32> to vector<32x128xbf16>
    %c0_48 = arith.constant 0 : index
    %c0_49 = arith.constant 0 : index
    %82 = vector.load %arg9[%c0_48, %c0_49] : memref<32x128xbf16, #tpu.memory_space<vmem>>, vector<32x128xbf16>
    tpu.vector_store %arg9[%c0_48, %c0_49], %81 {strides = array<i32>} : memref<32x128xbf16, #tpu.memory_space<vmem>>, vector<32x128xbf16>,
    return
  }
}

module attributes {stable_mosaic.version = 11 : i64} {
  func.func @_tail_kernel(%arg0: memref<32x128xbf16, #tpu.memory_space<vmem>>, %arg1: memref<2x16xf32, #tpu.memory_space<vmem>>, %arg2: memref<8x8xf32, #tpu.memory_space<vmem>>, %arg3: memref<2x8xf32, #tpu.memory_space<vmem>>, %arg4: memref<4x64xbf16, #tpu.memory_space<vmem>>, %arg5: memref<64x64xbf16, #tpu.memory_space<vmem>>, %arg6: memref<1x64xf32, #tpu.memory_space<vmem>>, %arg7: memref<128x128xbf16, #tpu.memory_space<vmem>>, %arg8: memref<1x128xf32, #tpu.memory_space<vmem>>, %arg9: memref<64x64xbf16, #tpu.memory_space<vmem>>, %arg10: memref<1x64xf32, #tpu.memory_space<vmem>>, %arg11: memref<64x32xbf16, #tpu.memory_space<vmem>>, %arg12: memref<1x32xf32, #tpu.memory_space<vmem>>, %arg13: memref<64x64xbf16, #tpu.memory_space<vmem>>, %arg14: memref<1x64xf32, #tpu.memory_space<vmem>>, %arg15: memref<32x32xbf16, #tpu.memory_space<vmem>>, %arg16: memref<1x32xf32, #tpu.memory_space<vmem>>, %arg17: memref<1x32xbf16, #tpu.memory_space<vmem>>, %arg18: memref<32x32xbf16, #tpu.memory_space<vmem>>, %arg19: memref<1x32xf32, #tpu.memory_space<vmem>>, %arg20: memref<32x64xbf16, #tpu.memory_space<vmem>>, %arg21: memref<1x64xf32, #tpu.memory_space<vmem>>, %arg22: memref<32x32xbf16, #tpu.memory_space<vmem>>, %arg23: memref<1x32xf32, #tpu.memory_space<vmem>>, %arg24: memref<32x32xbf16, #tpu.memory_space<vmem>>, %arg25: memref<1x32xf32, #tpu.memory_space<vmem>>, %arg26: memref<32x32xbf16, #tpu.memory_space<vmem>>, %arg27: memref<1x32xf32, #tpu.memory_space<vmem>>, %arg28: memref<32x16xbf16, #tpu.memory_space<vmem>>, %arg29: memref<1x16xf32, #tpu.memory_space<vmem>>, %arg30: memref<16x128xbf16, #tpu.memory_space<vmem>>, %arg31: memref<1x128xf32, #tpu.memory_space<vmem>>, %arg32: memref<2x128xf32, #tpu.memory_space<vmem>>) attributes {dimension_semantics = [], scalar_prefetch = 0 : i64, scratch_operands = 0 : i64, tpu.core_type = #tpu.core_type<tc>} {
    %c0 = arith.constant 0 : index
    %c0_0 = arith.constant 0 : index
    %0 = vector.load %arg0[%c0, %c0_0] : memref<32x128xbf16, #tpu.memory_space<vmem>>, vector<32x128xbf16>
    %c0_1 = arith.constant 0 : index
    %c0_2 = arith.constant 0 : index
    %1 = vector.load %arg1[%c0_1, %c0_2] : memref<2x16xf32, #tpu.memory_space<vmem>>, vector<2x16xf32>
    %c0_3 = arith.constant 0 : index
    %c0_4 = arith.constant 0 : index
    %2 = vector.load %arg2[%c0_3, %c0_4] : memref<8x8xf32, #tpu.memory_space<vmem>>, vector<8x8xf32>
    %c0_5 = arith.constant 0 : index
    %c0_6 = arith.constant 0 : index
    %3 = vector.load %arg3[%c0_5, %c0_6] : memref<2x8xf32, #tpu.memory_space<vmem>>, vector<2x8xf32>
    %c0_7 = arith.constant 0 : index
    %c0_8 = arith.constant 0 : index
    %4 = vector.load %arg4[%c0_7, %c0_8] : memref<4x64xbf16, #tpu.memory_space<vmem>>, vector<4x64xbf16>
    %c0_9 = arith.constant 0 : index
    %c0_10 = arith.constant 0 : index
    %5 = vector.load %arg5[%c0_9, %c0_10] : memref<64x64xbf16, #tpu.memory_space<vmem>>, vector<64x64xbf16>
    %cst = arith.constant dense<0.000000e+00> : vector<4x64xf32>
    %6 = tpu.matmul %4, %5, %cst {dimension_numbers = #tpu.dot_dimension_numbers<[1], [0], [0], [1], [0, 0, 1, 1], [], []>} : vector<4x64xbf16>, vector<64x64xbf16>, vector<4x64xf32> -> vector<4x64xf32>
    %c0_11 = arith.constant 0 : index
    %c0_12 = arith.constant 0 : index
    %7 = vector.load %arg6[%c0_11, %c0_12] : memref<1x64xf32, #tpu.memory_space<vmem>>, vector<1x64xf32>
    %8 = vector.broadcast %7 : vector<1x64xf32> to vector<4x64xf32>
    %9 = arith.addf %6, %8 : vector<4x64xf32>
    %c0_13 = arith.constant 0 : index
    %c0_14 = arith.constant 0 : index
    %10 = vector.load %arg17[%c0_13, %c0_14] : memref<1x32xbf16, #tpu.memory_space<vmem>>, vector<1x32xbf16>
    %c0_15 = arith.constant 0 : index
    %c0_16 = arith.constant 0 : index
    %11 = vector.load %arg18[%c0_15, %c0_16] : memref<32x32xbf16, #tpu.memory_space<vmem>>, vector<32x32xbf16>
    %cst_17 = arith.constant dense<0.000000e+00> : vector<1x32xf32>
    %12 = tpu.matmul %10, %11, %cst_17 {dimension_numbers = #tpu.dot_dimension_numbers<[1], [0], [0], [1], [0, 0, 1, 1], [], []>} : vector<1x32xbf16>, vector<32x32xbf16>, vector<1x32xf32> -> vector<1x32xf32>
    %c0_18 = arith.constant 0 : index
    %c0_19 = arith.constant 0 : index
    %13 = vector.load %arg19[%c0_18, %c0_19] : memref<1x32xf32, #tpu.memory_space<vmem>>, vector<1x32xf32>
    %14 = arith.addf %12, %13 : vector<1x32xf32>
    %c0_20 = arith.constant 0 : index
    %c0_21 = arith.constant 0 : index
    %15 = vector.load %arg7[%c0_20, %c0_21] : memref<128x128xbf16, #tpu.memory_space<vmem>>, vector<128x128xbf16>
    %cst_22 = arith.constant dense<0.000000e+00> : vector<32x128xf32>
    %16 = tpu.matmul %0, %15, %cst_22 {dimension_numbers = #tpu.dot_dimension_numbers<[1], [0], [0], [1], [0, 0, 1, 1], [], []>} : vector<32x128xbf16>, vector<128x128xbf16>, vector<32x128xf32> -> vector<32x128xf32>
    %c0_23 = arith.constant 0 : index
    %c0_24 = arith.constant 0 : index
    %17 = vector.load %arg8[%c0_23, %c0_24] : memref<1x128xf32, #tpu.memory_space<vmem>>, vector<1x128xf32>
    %18 = vector.broadcast %17 : vector<1x128xf32> to vector<32x128xf32>
    %19 = arith.addf %16, %18 : vector<32x128xf32>
    %20 = vector.extract_strided_slice %19 {offsets = [0, 0], sizes = [16, 128], strides = [1, 1]} : vector<32x128xf32> to vector<16x128xf32>
    %21 = vector.extract_strided_slice %20 {offsets = [0, 0], sizes = [16, 64], strides = [1, 1]} : vector<16x128xf32> to vector<16x64xf32>
    %22 = vector.extract_strided_slice %20 {offsets = [0, 64], sizes = [16, 64], strides = [1, 1]} : vector<16x128xf32> to vector<16x64xf32>
    %23 = vector.extract_strided_slice %1 {offsets = [0, 0], sizes = [1, 16], strides = [1, 1]} : vector<2x16xf32> to vector<1x16xf32>
    %24 = vector.extract_strided_slice %9 {offsets = [0, 0], sizes = [4, 32], strides = [1, 1]} : vector<4x64xf32> to vector<4x32xf32>
    %25 = vector.extract_strided_slice %21 {offsets = [0, 0], sizes = [16, 32], strides = [1, 1]} : vector<16x64xf32> to vector<16x32xf32>
    %26 = arith.truncf %25 : vector<16x32xf32> to vector<16x32xbf16>
    %27 = vector.extract_strided_slice %22 {offsets = [0, 0], sizes = [16, 32], strides = [1, 1]} : vector<16x64xf32> to vector<16x32xf32>
    %28 = arith.truncf %27 : vector<16x32xf32> to vector<16x32xbf16>
    %29 = arith.truncf %24 : vector<4x32xf32> to vector<4x32xbf16>
    %cst_25 = arith.constant dense<0.000000e+00> : vector<4x16xf32>
    %30 = tpu.matmul %29, %26, %cst_25 {dimension_numbers = #tpu.dot_dimension_numbers<[1], [1], [0], [0], [0, 0, 1, 0], [], []>} : vector<4x32xbf16>, vector<16x32xbf16>, vector<4x16xf32> -> vector<4x16xf32>
    %31 = vector.broadcast %23 : vector<1x16xf32> to vector<4x16xf32>
    %32 = arith.addf %30, %31 : vector<4x16xf32>
    %cst_26 = arith.constant dense<0xFF800000> : vector<4xf32>
    %33 = vector.multi_reduction <maximumf>, %32, %cst_26 [1] : vector<4x16xf32> to vector<4xf32>
    %34 = vector.shape_cast %33 : vector<4xf32> to vector<4x1xf32>
    %35 = vector.broadcast %34 : vector<4x1xf32> to vector<4x16xf32>
    %36 = arith.subf %32, %35 : vector<4x16xf32>
    %37 = math.exp %36 : vector<4x16xf32>
    %cst_27 = arith.constant dense<0.000000e+00> : vector<4xf32>
    %38 = vector.multi_reduction <add>, %37, %cst_27 [1] : vector<4x16xf32> to vector<4xf32>
    %39 = vector.shape_cast %38 : vector<4xf32> to vector<4x1xf32>
    %40 = tpu.reciprocal %39 {approx = true} : vector<4x1xf32> -> vector<4x1xf32>
    %41 = vector.broadcast %40 : vector<4x1xf32> to vector<4x16xf32>
    %42 = arith.mulf %37, %41 : vector<4x16xf32>
    %43 = arith.truncf %42 : vector<4x16xf32> to vector<4x16xbf16>
    %cst_28 = arith.constant dense<0.000000e+00> : vector<4x32xf32>
    %44 = tpu.matmul %43, %28, %cst_28 {dimension_numbers = #tpu.dot_dimension_numbers<[1], [0], [0], [1], [0, 0, 1, 1], [], []>} : vector<4x16xbf16>, vector<16x32xbf16>, vector<4x32xf32> -> vector<4x32xf32>
    %45 = arith.addf %24, %44 : vector<4x32xf32>
    %46 = vector.extract_strided_slice %9 {offsets = [0, 32], sizes = [4, 32], strides = [1, 1]} : vector<4x64xf32> to vector<4x32xf32>
    %47 = vector.extract_strided_slice %21 {offsets = [0, 32], sizes = [16, 32], strides = [1, 1]} : vector<16x64xf32> to vector<16x32xf32>
    %48 = arith.truncf %47 : vector<16x32xf32> to vector<16x32xbf16>
    %49 = vector.extract_strided_slice %22 {offsets = [0, 32], sizes = [16, 32], strides = [1, 1]} : vector<16x64xf32> to vector<16x32xf32>
    %50 = arith.truncf %49 : vector<16x32xf32> to vector<16x32xbf16>
    %51 = arith.truncf %46 : vector<4x32xf32> to vector<4x32xbf16>
    %cst_29 = arith.constant dense<0.000000e+00> : vector<4x16xf32>
    %52 = tpu.matmul %51, %48, %cst_29 {dimension_numbers = #tpu.dot_dimension_numbers<[1], [1], [0], [0], [0, 0, 1, 0], [], []>} : vector<4x32xbf16>, vector<16x32xbf16>, vector<4x16xf32> -> vector<4x16xf32>
    %53 = vector.broadcast %23 : vector<1x16xf32> to vector<4x16xf32>
    %54 = arith.addf %52, %53 : vector<4x16xf32>
    %cst_30 = arith.constant dense<0xFF800000> : vector<4xf32>
    %55 = vector.multi_reduction <maximumf>, %54, %cst_30 [1] : vector<4x16xf32> to vector<4xf32>
    %56 = vector.shape_cast %55 : vector<4xf32> to vector<4x1xf32>
    %57 = vector.broadcast %56 : vector<4x1xf32> to vector<4x16xf32>
    %58 = arith.subf %54, %57 : vector<4x16xf32>
    %59 = math.exp %58 : vector<4x16xf32>
    %cst_31 = arith.constant dense<0.000000e+00> : vector<4xf32>
    %60 = vector.multi_reduction <add>, %59, %cst_31 [1] : vector<4x16xf32> to vector<4xf32>
    %61 = vector.shape_cast %60 : vector<4xf32> to vector<4x1xf32>
    %62 = tpu.reciprocal %61 {approx = true} : vector<4x1xf32> -> vector<4x1xf32>
    %63 = vector.broadcast %62 : vector<4x1xf32> to vector<4x16xf32>
    %64 = arith.mulf %59, %63 : vector<4x16xf32>
    %65 = arith.truncf %64 : vector<4x16xf32> to vector<4x16xbf16>
    %cst_32 = arith.constant dense<0.000000e+00> : vector<4x32xf32>
    %66 = tpu.matmul %65, %50, %cst_32 {dimension_numbers = #tpu.dot_dimension_numbers<[1], [0], [0], [1], [0, 0, 1, 1], [], []>} : vector<4x16xbf16>, vector<16x32xbf16>, vector<4x32xf32> -> vector<4x32xf32>
    %67 = arith.addf %46, %66 : vector<4x32xf32>
    %68 = tpu.concatenate %45, %67 in 1 : vector<4x32xf32>, vector<4x32xf32> -> vector<4x64xf32>
    %69 = vector.extract_strided_slice %19 {offsets = [16, 0], sizes = [16, 128], strides = [1, 1]} : vector<32x128xf32> to vector<16x128xf32>
    %70 = vector.extract_strided_slice %69 {offsets = [0, 0], sizes = [16, 64], strides = [1, 1]} : vector<16x128xf32> to vector<16x64xf32>
    %71 = vector.extract_strided_slice %69 {offsets = [0, 64], sizes = [16, 64], strides = [1, 1]} : vector<16x128xf32> to vector<16x64xf32>
    %72 = vector.extract_strided_slice %1 {offsets = [1, 0], sizes = [1, 16], strides = [1, 1]} : vector<2x16xf32> to vector<1x16xf32>
    %73 = vector.extract_strided_slice %9 {offsets = [0, 0], sizes = [4, 32], strides = [1, 1]} : vector<4x64xf32> to vector<4x32xf32>
    %74 = vector.extract_strided_slice %70 {offsets = [0, 0], sizes = [16, 32], strides = [1, 1]} : vector<16x64xf32> to vector<16x32xf32>
    %75 = arith.truncf %74 : vector<16x32xf32> to vector<16x32xbf16>
    %76 = vector.extract_strided_slice %71 {offsets = [0, 0], sizes = [16, 32], strides = [1, 1]} : vector<16x64xf32> to vector<16x32xf32>
    %77 = arith.truncf %76 : vector<16x32xf32> to vector<16x32xbf16>
    %78 = arith.truncf %73 : vector<4x32xf32> to vector<4x32xbf16>
    %cst_33 = arith.constant dense<0.000000e+00> : vector<4x16xf32>
    %79 = tpu.matmul %78, %75, %cst_33 {dimension_numbers = #tpu.dot_dimension_numbers<[1], [1], [0], [0], [0, 0, 1, 0], [], []>} : vector<4x32xbf16>, vector<16x32xbf16>, vector<4x16xf32> -> vector<4x16xf32>
    %80 = vector.broadcast %72 : vector<1x16xf32> to vector<4x16xf32>
    %81 = arith.addf %79, %80 : vector<4x16xf32>
    %cst_34 = arith.constant dense<0xFF800000> : vector<4xf32>
    %82 = vector.multi_reduction <maximumf>, %81, %cst_34 [1] : vector<4x16xf32> to vector<4xf32>
    %83 = vector.shape_cast %82 : vector<4xf32> to vector<4x1xf32>
    %84 = vector.broadcast %83 : vector<4x1xf32> to vector<4x16xf32>
    %85 = arith.subf %81, %84 : vector<4x16xf32>
    %86 = math.exp %85 : vector<4x16xf32>
    %cst_35 = arith.constant dense<0.000000e+00> : vector<4xf32>
    %87 = vector.multi_reduction <add>, %86, %cst_35 [1] : vector<4x16xf32> to vector<4xf32>
    %88 = vector.shape_cast %87 : vector<4xf32> to vector<4x1xf32>
    %89 = tpu.reciprocal %88 {approx = true} : vector<4x1xf32> -> vector<4x1xf32>
    %90 = vector.broadcast %89 : vector<4x1xf32> to vector<4x16xf32>
    %91 = arith.mulf %86, %90 : vector<4x16xf32>
    %92 = arith.truncf %91 : vector<4x16xf32> to vector<4x16xbf16>
    %cst_36 = arith.constant dense<0.000000e+00> : vector<4x32xf32>
    %93 = tpu.matmul %92, %77, %cst_36 {dimension_numbers = #tpu.dot_dimension_numbers<[1], [0], [0], [1], [0, 0, 1, 1], [], []>} : vector<4x16xbf16>, vector<16x32xbf16>, vector<4x32xf32> -> vector<4x32xf32>
    %94 = arith.addf %73, %93 : vector<4x32xf32>
    %95 = vector.extract_strided_slice %9 {offsets = [0, 32], sizes = [4, 32], strides = [1, 1]} : vector<4x64xf32> to vector<4x32xf32>
    %96 = vector.extract_strided_slice %70 {offsets = [0, 32], sizes = [16, 32], strides = [1, 1]} : vector<16x64xf32> to vector<16x32xf32>
    %97 = arith.truncf %96 : vector<16x32xf32> to vector<16x32xbf16>
    %98 = vector.extract_strided_slice %71 {offsets = [0, 32], sizes = [16, 32], strides = [1, 1]} : vector<16x64xf32> to vector<16x32xf32>
    %99 = arith.truncf %98 : vector<16x32xf32> to vector<16x32xbf16>
    %100 = arith.truncf %95 : vector<4x32xf32> to vector<4x32xbf16>
    %cst_37 = arith.constant dense<0.000000e+00> : vector<4x16xf32>
    %101 = tpu.matmul %100, %97, %cst_37 {dimension_numbers = #tpu.dot_dimension_numbers<[1], [1], [0], [0], [0, 0, 1, 0], [], []>} : vector<4x32xbf16>, vector<16x32xbf16>, vector<4x16xf32> -> vector<4x16xf32>
    %102 = vector.broadcast %72 : vector<1x16xf32> to vector<4x16xf32>
    %103 = arith.addf %101, %102 : vector<4x16xf32>
    %cst_38 = arith.constant dense<0xFF800000> : vector<4xf32>
    %104 = vector.multi_reduction <maximumf>, %103, %cst_38 [1] : vector<4x16xf32> to vector<4xf32>
    %105 = vector.shape_cast %104 : vector<4xf32> to vector<4x1xf32>
    %106 = vector.broadcast %105 : vector<4x1xf32> to vector<4x16xf32>
    %107 = arith.subf %103, %106 : vector<4x16xf32>
    %108 = math.exp %107 : vector<4x16xf32>
    %cst_39 = arith.constant dense<0.000000e+00> : vector<4xf32>
    %109 = vector.multi_reduction <add>, %108, %cst_39 [1] : vector<4x16xf32> to vector<4xf32>
    %110 = vector.shape_cast %109 : vector<4xf32> to vector<4x1xf32>
    %111 = tpu.reciprocal %110 {approx = true} : vector<4x1xf32> -> vector<4x1xf32>
    %112 = vector.broadcast %111 : vector<4x1xf32> to vector<4x16xf32>
    %113 = arith.mulf %108, %112 : vector<4x16xf32>
    %114 = arith.truncf %113 : vector<4x16xf32> to vector<4x16xbf16>
    %cst_40 = arith.constant dense<0.000000e+00> : vector<4x32xf32>
    %115 = tpu.matmul %114, %99, %cst_40 {dimension_numbers = #tpu.dot_dimension_numbers<[1], [0], [0], [1], [0, 0, 1, 1], [], []>} : vector<4x16xbf16>, vector<16x32xbf16>, vector<4x32xf32> -> vector<4x32xf32>
    %116 = arith.addf %95, %115 : vector<4x32xf32>
    %117 = tpu.concatenate %94, %116 in 1 : vector<4x32xf32>, vector<4x32xf32> -> vector<4x64xf32>
    %118 = tpu.concatenate %68, %117 in 0 : vector<4x64xf32>, vector<4x64xf32> -> vector<8x64xf32>
    %119 = arith.truncf %118 : vector<8x64xf32> to vector<8x64xbf16>
    %c0_41 = arith.constant 0 : index
    %c0_42 = arith.constant 0 : index
    %120 = vector.load %arg9[%c0_41, %c0_42] : memref<64x64xbf16, #tpu.memory_space<vmem>>, vector<64x64xbf16>
    %cst_43 = arith.constant dense<0.000000e+00> : vector<8x64xf32>
    %121 = tpu.matmul %119, %120, %cst_43 {dimension_numbers = #tpu.dot_dimension_numbers<[1], [0], [0], [1], [0, 0, 1, 1], [], []>} : vector<8x64xbf16>, vector<64x64xbf16>, vector<8x64xf32> -> vector<8x64xf32>
    %c0_44 = arith.constant 0 : index
    %c0_45 = arith.constant 0 : index
    %122 = vector.load %arg10[%c0_44, %c0_45] : memref<1x64xf32, #tpu.memory_space<vmem>>, vector<1x64xf32>
    %123 = vector.broadcast %122 : vector<1x64xf32> to vector<8x64xf32>
    %124 = arith.addf %121, %123 : vector<8x64xf32>
    %cst_46 = arith.constant 0.000000e+00 : f32
    %125 = vector.broadcast %cst_46 : f32 to vector<8x64xf32>
    %126 = arith.maximumf %124, %125 : vector<8x64xf32>
    %127 = arith.addf %118, %126 : vector<8x64xf32>
    %128 = arith.truncf %127 : vector<8x64xf32> to vector<8x64xbf16>
    %c0_47 = arith.constant 0 : index
    %c0_48 = arith.constant 0 : index
    %129 = vector.load %arg11[%c0_47, %c0_48] : memref<64x32xbf16, #tpu.memory_space<vmem>>, vector<64x32xbf16>
    %cst_49 = arith.constant dense<0.000000e+00> : vector<8x32xf32>
    %130 = tpu.matmul %128, %129, %cst_49 {dimension_numbers = #tpu.dot_dimension_numbers<[1], [0], [0], [1], [0, 0, 1, 1], [], []>} : vector<8x64xbf16>, vector<64x32xbf16>, vector<8x32xf32> -> vector<8x32xf32>
    %c0_50 = arith.constant 0 : index
    %c0_51 = arith.constant 0 : index
    %131 = vector.load %arg12[%c0_50, %c0_51] : memref<1x32xf32, #tpu.memory_space<vmem>>, vector<1x32xf32>
    %132 = vector.broadcast %131 : vector<1x32xf32> to vector<8x32xf32>
    %133 = arith.addf %130, %132 : vector<8x32xf32>
    %c0_52 = arith.constant 0 : index
    %c0_53 = arith.constant 0 : index
    %134 = vector.load %arg13[%c0_52, %c0_53] : memref<64x64xbf16, #tpu.memory_space<vmem>>, vector<64x64xbf16>
    %cst_54 = arith.constant dense<0.000000e+00> : vector<8x64xf32>
    %135 = tpu.matmul %128, %134, %cst_54 {dimension_numbers = #tpu.dot_dimension_numbers<[1], [0], [0], [1], [0, 0, 1, 1], [], []>} : vector<8x64xbf16>, vector<64x64xbf16>, vector<8x64xf32> -> vector<8x64xf32>
    %c0_55 = arith.constant 0 : index
    %c0_56 = arith.constant 0 : index
    %136 = vector.load %arg14[%c0_55, %c0_56] : memref<1x64xf32, #tpu.memory_space<vmem>>, vector<1x64xf32>
    %137 = vector.broadcast %136 : vector<1x64xf32> to vector<8x64xf32>
    %138 = arith.addf %135, %137 : vector<8x64xf32>
    %139 = vector.extract_strided_slice %138 {offsets = [0, 0], sizes = [8, 32], strides = [1, 1]} : vector<8x64xf32> to vector<8x32xf32>
    %140 = vector.extract_strided_slice %138 {offsets = [0, 32], sizes = [8, 32], strides = [1, 1]} : vector<8x64xf32> to vector<8x32xf32>
    %141 = vector.extract_strided_slice %133 {offsets = [0, 0], sizes = [8, 16], strides = [1, 1]} : vector<8x32xf32> to vector<8x16xf32>
    %142 = vector.extract_strided_slice %139 {offsets = [0, 0], sizes = [8, 16], strides = [1, 1]} : vector<8x32xf32> to vector<8x16xf32>
    %143 = arith.truncf %142 : vector<8x16xf32> to vector<8x16xbf16>
    %144 = vector.extract_strided_slice %140 {offsets = [0, 0], sizes = [8, 16], strides = [1, 1]} : vector<8x32xf32> to vector<8x16xf32>
    %145 = arith.truncf %144 : vector<8x16xf32> to vector<8x16xbf16>
    %146 = arith.truncf %141 : vector<8x16xf32> to vector<8x16xbf16>
    %cst_57 = arith.constant dense<0.000000e+00> : vector<8x8xf32>
    %147 = tpu.matmul %146, %143, %cst_57 {dimension_numbers = #tpu.dot_dimension_numbers<[1], [1], [0], [0], [0, 0, 1, 0], [], []>} : vector<8x16xbf16>, vector<8x16xbf16>, vector<8x8xf32> -> vector<8x8xf32>
    %148 = arith.addf %147, %2 : vector<8x8xf32>
    %cst_58 = arith.constant dense<0xFF800000> : vector<8xf32>
    %149 = vector.multi_reduction <maximumf>, %148, %cst_58 [1] : vector<8x8xf32> to vector<8xf32>
    %150 = vector.shape_cast %149 : vector<8xf32> to vector<8x1xf32>
    %151 = vector.broadcast %150 : vector<8x1xf32> to vector<8x8xf32>
    %152 = arith.subf %148, %151 : vector<8x8xf32>
    %153 = math.exp %152 : vector<8x8xf32>
    %cst_59 = arith.constant dense<0.000000e+00> : vector<8xf32>
    %154 = vector.multi_reduction <add>, %153, %cst_59 [1] : vector<8x8xf32> to vector<8xf32>
    %155 = vector.shape_cast %154 : vector<8xf32> to vector<8x1xf32>
    %156 = tpu.reciprocal %155 {approx = true} : vector<8x1xf32> -> vector<8x1xf32>
    %157 = vector.broadcast %156 : vector<8x1xf32> to vector<8x8xf32>
    %158 = arith.mulf %153, %157 : vector<8x8xf32>
    %159 = arith.truncf %158 : vector<8x8xf32> to vector<8x8xbf16>
    %cst_60 = arith.constant dense<0.000000e+00> : vector<8x16xf32>
    %160 = tpu.matmul %159, %145, %cst_60 {dimension_numbers = #tpu.dot_dimension_numbers<[1], [0], [0], [1], [0, 0, 1, 1], [], []>} : vector<8x8xbf16>, vector<8x16xbf16>, vector<8x16xf32> -> vector<8x16xf32>
    %161 = arith.addf %141, %160 : vector<8x16xf32>
    %162 = vector.extract_strided_slice %133 {offsets = [0, 16], sizes = [8, 16], strides = [1, 1]} : vector<8x32xf32> to vector<8x16xf32>
    %163 = vector.extract_strided_slice %139 {offsets = [0, 16], sizes = [8, 16], strides = [1, 1]} : vector<8x32xf32> to vector<8x16xf32>
    %164 = arith.truncf %163 : vector<8x16xf32> to vector<8x16xbf16>
    %165 = vector.extract_strided_slice %140 {offsets = [0, 16], sizes = [8, 16], strides = [1, 1]} : vector<8x32xf32> to vector<8x16xf32>
    %166 = arith.truncf %165 : vector<8x16xf32> to vector<8x16xbf16>
    %167 = arith.truncf %162 : vector<8x16xf32> to vector<8x16xbf16>
    %cst_61 = arith.constant dense<0.000000e+00> : vector<8x8xf32>
    %168 = tpu.matmul %167, %164, %cst_61 {dimension_numbers = #tpu.dot_dimension_numbers<[1], [1], [0], [0], [0, 0, 1, 0], [], []>} : vector<8x16xbf16>, vector<8x16xbf16>, vector<8x8xf32> -> vector<8x8xf32>
    %169 = arith.addf %168, %2 : vector<8x8xf32>
    %cst_62 = arith.constant dense<0xFF800000> : vector<8xf32>
    %170 = vector.multi_reduction <maximumf>, %169, %cst_62 [1] : vector<8x8xf32> to vector<8xf32>
    %171 = vector.shape_cast %170 : vector<8xf32> to vector<8x1xf32>
    %172 = vector.broadcast %171 : vector<8x1xf32> to vector<8x8xf32>
    %173 = arith.subf %169, %172 : vector<8x8xf32>
    %174 = math.exp %173 : vector<8x8xf32>
    %cst_63 = arith.constant dense<0.000000e+00> : vector<8xf32>
    %175 = vector.multi_reduction <add>, %174, %cst_63 [1] : vector<8x8xf32> to vector<8xf32>
    %176 = vector.shape_cast %175 : vector<8xf32> to vector<8x1xf32>
    %177 = tpu.reciprocal %176 {approx = true} : vector<8x1xf32> -> vector<8x1xf32>
    %178 = vector.broadcast %177 : vector<8x1xf32> to vector<8x8xf32>
    %179 = arith.mulf %174, %178 : vector<8x8xf32>
    %180 = arith.truncf %179 : vector<8x8xf32> to vector<8x8xbf16>
    %cst_64 = arith.constant dense<0.000000e+00> : vector<8x16xf32>
    %181 = tpu.matmul %180, %166, %cst_64 {dimension_numbers = #tpu.dot_dimension_numbers<[1], [0], [0], [1], [0, 0, 1, 1], [], []>} : vector<8x8xbf16>, vector<8x16xbf16>, vector<8x16xf32> -> vector<8x16xf32>
    %182 = arith.addf %162, %181 : vector<8x16xf32>
    %183 = tpu.concatenate %161, %182 in 1 : vector<8x16xf32>, vector<8x16xf32> -> vector<8x32xf32>
    %184 = arith.truncf %183 : vector<8x32xf32> to vector<8x32xbf16>
    %c0_65 = arith.constant 0 : index
    %c0_66 = arith.constant 0 : index
    %185 = vector.load %arg15[%c0_65, %c0_66] : memref<32x32xbf16, #tpu.memory_space<vmem>>, vector<32x32xbf16>
    %cst_67 = arith.constant dense<0.000000e+00> : vector<8x32xf32>
    %186 = tpu.matmul %184, %185, %cst_67 {dimension_numbers = #tpu.dot_dimension_numbers<[1], [0], [0], [1], [0, 0, 1, 1], [], []>} : vector<8x32xbf16>, vector<32x32xbf16>, vector<8x32xf32> -> vector<8x32xf32>
    %c0_68 = arith.constant 0 : index
    %c0_69 = arith.constant 0 : index
    %187 = vector.load %arg16[%c0_68, %c0_69] : memref<1x32xf32, #tpu.memory_space<vmem>>, vector<1x32xf32>
    %188 = vector.broadcast %187 : vector<1x32xf32> to vector<8x32xf32>
    %189 = arith.addf %186, %188 : vector<8x32xf32>
    %cst_70 = arith.constant 0.000000e+00 : f32
    %190 = vector.broadcast %cst_70 : f32 to vector<8x32xf32>
    %191 = arith.maximumf %189, %190 : vector<8x32xf32>
    %192 = arith.addf %183, %191 : vector<8x32xf32>
    %193 = arith.truncf %192 : vector<8x32xf32> to vector<8x32xbf16>
    %c0_71 = arith.constant 0 : index
    %c0_72 = arith.constant 0 : index
    %194 = vector.load %arg20[%c0_71, %c0_72] : memref<32x64xbf16, #tpu.memory_space<vmem>>, vector<32x64xbf16>
    %cst_73 = arith.constant dense<0.000000e+00> : vector<8x64xf32>
    %195 = tpu.matmul %193, %194, %cst_73 {dimension_numbers = #tpu.dot_dimension_numbers<[1], [0], [0], [1], [0, 0, 1, 1], [], []>} : vector<8x32xbf16>, vector<32x64xbf16>, vector<8x64xf32> -> vector<8x64xf32>
    %c0_74 = arith.constant 0 : index
    %c0_75 = arith.constant 0 : index
    %196 = vector.load %arg21[%c0_74, %c0_75] : memref<1x64xf32, #tpu.memory_space<vmem>>, vector<1x64xf32>
    %197 = vector.broadcast %196 : vector<1x64xf32> to vector<8x64xf32>
    %198 = arith.addf %195, %197 : vector<8x64xf32>
    %199 = vector.shape_cast %14 : vector<1x32xf32> to vector<1x32xf32>
    %200 = vector.broadcast %199 : vector<1x32xf32> to vector<2x32xf32>
    %201 = vector.extract_strided_slice %198 {offsets = [0, 0], sizes = [8, 32], strides = [1, 1]} : vector<8x64xf32> to vector<8x32xf32>
    %202 = vector.extract_strided_slice %198 {offsets = [0, 32], sizes = [8, 32], strides = [1, 1]} : vector<8x64xf32> to vector<8x32xf32>
    %203 = vector.extract_strided_slice %200 {offsets = [0, 0], sizes = [2, 16], strides = [1, 1]} : vector<2x32xf32> to vector<2x16xf32>
    %204 = vector.extract_strided_slice %201 {offsets = [0, 0], sizes = [8, 16], strides = [1, 1]} : vector<8x32xf32> to vector<8x16xf32>
    %205 = arith.truncf %204 : vector<8x16xf32> to vector<8x16xbf16>
    %206 = vector.extract_strided_slice %202 {offsets = [0, 0], sizes = [8, 16], strides = [1, 1]} : vector<8x32xf32> to vector<8x16xf32>
    %207 = arith.truncf %206 : vector<8x16xf32> to vector<8x16xbf16>
    %208 = arith.truncf %203 : vector<2x16xf32> to vector<2x16xbf16>
    %cst_76 = arith.constant dense<0.000000e+00> : vector<2x8xf32>
    %209 = tpu.matmul %208, %205, %cst_76 {dimension_numbers = #tpu.dot_dimension_numbers<[1], [1], [0], [0], [0, 0, 1, 0], [], []>} : vector<2x16xbf16>, vector<8x16xbf16>, vector<2x8xf32> -> vector<2x8xf32>
    %210 = arith.addf %209, %3 : vector<2x8xf32>
    %cst_77 = arith.constant dense<0xFF800000> : vector<2xf32>
    %211 = vector.multi_reduction <maximumf>, %210, %cst_77 [1] : vector<2x8xf32> to vector<2xf32>
    %212 = vector.shape_cast %211 : vector<2xf32> to vector<2x1xf32>
    %213 = vector.broadcast %212 : vector<2x1xf32> to vector<2x8xf32>
    %214 = arith.subf %210, %213 : vector<2x8xf32>
    %215 = math.exp %214 : vector<2x8xf32>
    %cst_78 = arith.constant dense<0.000000e+00> : vector<2xf32>
    %216 = vector.multi_reduction <add>, %215, %cst_78 [1] : vector<2x8xf32> to vector<2xf32>
    %217 = vector.shape_cast %216 : vector<2xf32> to vector<2x1xf32>
    %218 = tpu.reciprocal %217 {approx = true} : vector<2x1xf32> -> vector<2x1xf32>
    %219 = vector.broadcast %218 : vector<2x1xf32> to vector<2x8xf32>
    %220 = arith.mulf %215, %219 : vector<2x8xf32>
    %221 = arith.truncf %220 : vector<2x8xf32> to vector<2x8xbf16>
    %cst_79 = arith.constant dense<0.000000e+00> : vector<2x16xf32>
    %222 = tpu.matmul %221, %207, %cst_79 {dimension_numbers = #tpu.dot_dimension_numbers<[1], [0], [0], [1], [0, 0, 1, 1], [], []>} : vector<2x8xbf16>, vector<8x16xbf16>, vector<2x16xf32> -> vector<2x16xf32>
    %223 = arith.addf %203, %222 : vector<2x16xf32>
    %224 = vector.extract_strided_slice %200 {offsets = [0, 16], sizes = [2, 16], strides = [1, 1]} : vector<2x32xf32> to vector<2x16xf32>
    %225 = vector.extract_strided_slice %201 {offsets = [0, 16], sizes = [8, 16], strides = [1, 1]} : vector<8x32xf32> to vector<8x16xf32>
    %226 = arith.truncf %225 : vector<8x16xf32> to vector<8x16xbf16>
    %227 = vector.extract_strided_slice %202 {offsets = [0, 16], sizes = [8, 16], strides = [1, 1]} : vector<8x32xf32> to vector<8x16xf32>
    %228 = arith.truncf %227 : vector<8x16xf32> to vector<8x16xbf16>
    %229 = arith.truncf %224 : vector<2x16xf32> to vector<2x16xbf16>
    %cst_80 = arith.constant dense<0.000000e+00> : vector<2x8xf32>
    %230 = tpu.matmul %229, %226, %cst_80 {dimension_numbers = #tpu.dot_dimension_numbers<[1], [1], [0], [0], [0, 0, 1, 0], [], []>} : vector<2x16xbf16>, vector<8x16xbf16>, vector<2x8xf32> -> vector<2x8xf32>
    %231 = arith.addf %230, %3 : vector<2x8xf32>
    %cst_81 = arith.constant dense<0xFF800000> : vector<2xf32>
    %232 = vector.multi_reduction <maximumf>, %231, %cst_81 [1] : vector<2x8xf32> to vector<2xf32>
    %233 = vector.shape_cast %232 : vector<2xf32> to vector<2x1xf32>
    %234 = vector.broadcast %233 : vector<2x1xf32> to vector<2x8xf32>
    %235 = arith.subf %231, %234 : vector<2x8xf32>
    %236 = math.exp %235 : vector<2x8xf32>
    %cst_82 = arith.constant dense<0.000000e+00> : vector<2xf32>
    %237 = vector.multi_reduction <add>, %236, %cst_82 [1] : vector<2x8xf32> to vector<2xf32>
    %238 = vector.shape_cast %237 : vector<2xf32> to vector<2x1xf32>
    %239 = tpu.reciprocal %238 {approx = true} : vector<2x1xf32> -> vector<2x1xf32>
    %240 = vector.broadcast %239 : vector<2x1xf32> to vector<2x8xf32>
    %241 = arith.mulf %236, %240 : vector<2x8xf32>
    %242 = arith.truncf %241 : vector<2x8xf32> to vector<2x8xbf16>
    %cst_83 = arith.constant dense<0.000000e+00> : vector<2x16xf32>
    %243 = tpu.matmul %242, %228, %cst_83 {dimension_numbers = #tpu.dot_dimension_numbers<[1], [0], [0], [1], [0, 0, 1, 1], [], []>} : vector<2x8xbf16>, vector<8x16xbf16>, vector<2x16xf32> -> vector<2x16xf32>
    %244 = arith.addf %224, %243 : vector<2x16xf32>
    %245 = tpu.concatenate %223, %244 in 1 : vector<2x16xf32>, vector<2x16xf32> -> vector<2x32xf32>
    %246 = arith.truncf %245 : vector<2x32xf32> to vector<2x32xbf16>
    %c0_84 = arith.constant 0 : index
    %c0_85 = arith.constant 0 : index
    %247 = vector.load %arg22[%c0_84, %c0_85] : memref<32x32xbf16, #tpu.memory_space<vmem>>, vector<32x32xbf16>
    %cst_86 = arith.constant dense<0.000000e+00> : vector<2x32xf32>
    %248 = tpu.matmul %246, %247, %cst_86 {dimension_numbers = #tpu.dot_dimension_numbers<[1], [0], [0], [1], [0, 0, 1, 1], [], []>} : vector<2x32xbf16>, vector<32x32xbf16>, vector<2x32xf32> -> vector<2x32xf32>
    %c0_87 = arith.constant 0 : index
    %c0_88 = arith.constant 0 : index
    %249 = vector.load %arg23[%c0_87, %c0_88] : memref<1x32xf32, #tpu.memory_space<vmem>>, vector<1x32xf32>
    %250 = vector.broadcast %249 : vector<1x32xf32> to vector<2x32xf32>
    %251 = arith.addf %248, %250 : vector<2x32xf32>
    %cst_89 = arith.constant 0.000000e+00 : f32
    %252 = vector.broadcast %cst_89 : f32 to vector<2x32xf32>
    %253 = arith.maximumf %251, %252 : vector<2x32xf32>
    %254 = arith.addf %245, %253 : vector<2x32xf32>
    %255 = arith.truncf %254 : vector<2x32xf32> to vector<2x32xbf16>
    %c0_90 = arith.constant 0 : index
    %c0_91 = arith.constant 0 : index
    %256 = vector.load %arg24[%c0_90, %c0_91] : memref<32x32xbf16, #tpu.memory_space<vmem>>, vector<32x32xbf16>
    %cst_92 = arith.constant dense<0.000000e+00> : vector<2x32xf32>
    %257 = tpu.matmul %255, %256, %cst_92 {dimension_numbers = #tpu.dot_dimension_numbers<[1], [0], [0], [1], [0, 0, 1, 1], [], []>} : vector<2x32xbf16>, vector<32x32xbf16>, vector<2x32xf32> -> vector<2x32xf32>
    %c0_93 = arith.constant 0 : index
    %c0_94 = arith.constant 0 : index
    %258 = vector.load %arg25[%c0_93, %c0_94] : memref<1x32xf32, #tpu.memory_space<vmem>>, vector<1x32xf32>
    %259 = vector.broadcast %258 : vector<1x32xf32> to vector<2x32xf32>
    %260 = arith.addf %257, %259 : vector<2x32xf32>
    %261 = arith.truncf %260 : vector<2x32xf32> to vector<2x32xbf16>
    %c0_95 = arith.constant 0 : index
    %c0_96 = arith.constant 0 : index
    %262 = vector.load %arg26[%c0_95, %c0_96] : memref<32x32xbf16, #tpu.memory_space<vmem>>, vector<32x32xbf16>
    %cst_97 = arith.constant dense<0.000000e+00> : vector<2x32xf32>
    %263 = tpu.matmul %261, %262, %cst_97 {dimension_numbers = #tpu.dot_dimension_numbers<[1], [0], [0], [1], [0, 0, 1, 1], [], []>} : vector<2x32xbf16>, vector<32x32xbf16>, vector<2x32xf32> -> vector<2x32xf32>
    %c0_98 = arith.constant 0 : index
    %c0_99 = arith.constant 0 : index
    %264 = vector.load %arg27[%c0_98, %c0_99] : memref<1x32xf32, #tpu.memory_space<vmem>>, vector<1x32xf32>
    %265 = vector.broadcast %264 : vector<1x32xf32> to vector<2x32xf32>
    %266 = arith.addf %263, %265 : vector<2x32xf32>
    %cst_100 = arith.constant 0.000000e+00 : f32
    %267 = vector.broadcast %cst_100 : f32 to vector<2x32xf32>
    %268 = arith.maximumf %266, %267 : vector<2x32xf32>
    %269 = arith.truncf %268 : vector<2x32xf32> to vector<2x32xbf16>
    %c0_101 = arith.constant 0 : index
    %c0_102 = arith.constant 0 : index
    %270 = vector.load %arg28[%c0_101, %c0_102] : memref<32x16xbf16, #tpu.memory_space<vmem>>, vector<32x16xbf16>
    %cst_103 = arith.constant dense<0.000000e+00> : vector<2x16xf32>
    %271 = tpu.matmul %269, %270, %cst_103 {dimension_numbers = #tpu.dot_dimension_numbers<[1], [0], [0], [1], [0, 0, 1, 1], [], []>} : vector<2x32xbf16>, vector<32x16xbf16>, vector<2x16xf32> -> vector<2x16xf32>
    %c0_104 = arith.constant 0 : index
    %c0_105 = arith.constant 0 : index
    %272 = vector.load %arg29[%c0_104, %c0_105] : memref<1x16xf32, #tpu.memory_space<vmem>>, vector<1x16xf32>
    %273 = vector.broadcast %272 : vector<1x16xf32> to vector<2x16xf32>
    %274 = arith.addf %271, %273 : vector<2x16xf32>
    %cst_106 = arith.constant 0.000000e+00 : f32
    %275 = vector.broadcast %cst_106 : f32 to vector<2x16xf32>
    %276 = arith.maximumf %274, %275 : vector<2x16xf32>
    %277 = arith.truncf %276 : vector<2x16xf32> to vector<2x16xbf16>
    %c0_107 = arith.constant 0 : index
    %c0_108 = arith.constant 0 : index
    %278 = vector.load %arg30[%c0_107, %c0_108] : memref<16x128xbf16, #tpu.memory_space<vmem>>, vector<16x128xbf16>
    %cst_109 = arith.constant dense<0.000000e+00> : vector<2x128xf32>
    %279 = tpu.matmul %277, %278, %cst_109 {dimension_numbers = #tpu.dot_dimension_numbers<[1], [0], [0], [1], [0, 0, 1, 1], [], []>} : vector<2x16xbf16>, vector<16x128xbf16>, vector<2x128xf32> -> vector<2x128xf32>
    %c0_110 = arith.constant 0 : index
    %c0_111 = arith.constant 0 : index
    %280 = vector.load %arg31[%c0_110, %c0_111] : memref<1x128xf32, #tpu.memory_space<vmem>>, vector<1x128xf32>
    %281 = vector.broadcast %280 : vector<1x128xf32> to vector<2x128xf32>
    %282 = arith.addf %279, %281 : vector<2x128xf32>
    %c0_112 = arith.constant 0 : index
    %c0_113 = arith.constant 0 : index
    %283 = vector.load %arg32[%c0_112, %c0_113] : memref<2x128xf32, #tpu.memory_space<vmem>>, vector<2x128xf32>
    tpu.vector_store %arg32[%c0_112, %c0_113], %282 {strides = array<i32>} : memref<2x128xf32, #tpu.memory_space<vmem>>, vector<2x128xf32>,
    return
  }
}

</mosaic_0001>

<llo_original>
// kernel: _forward_impl.2
$region0: #{_forward_impl.2}
  #allocation0 [shape = 'u32[]', space=smem, size = 0x4, offset = 0x4, fixed_abs, tag = 'smem constant byte address 0x4 - core index']
  #allocation1 [shape = 'u32[72,128]{1,0:T(1,128)}', space=vmem, size = 0x9000, scoped, tag = 'internal scratch']
  %s0 = inlined_call_operand.vmem [shape: f32[32,32], index: 0, kind: input, shape index: {}]
  %s1 = inlined_call_operand.vmem [shape: s32[32,1], index: 1, kind: input, shape index: {}]
  %s2 = inlined_call_operand.vmem [shape: s32[1,32], index: 2, kind: input, shape index: {}]
  %s3 = inlined_call_operand.vmem [shape: f32[32,1], index: 3, kind: input, shape index: {}]
  %s4 = inlined_call_operand.vmem [shape: f32[32,1], index: 4, kind: input, shape index: {}]
  %s5 = inlined_call_operand.vmem [shape: bf16[2,32,32], index: 5, kind: input, shape index: {}]
  %s6 = inlined_call_operand.vmem [shape: f32[2,1,32], index: 6, kind: input, shape index: {}]
  %s7 = inlined_call_operand.vmem [shape: f32[2,32,32], index: 7, kind: input, shape index: {}]
  %s8 = inlined_call_operand.vmem [shape: f32[2,1,32], index: 8, kind: input, shape index: {}]
  %s9 = inlined_call_operand.vmem [shape: bf16[32,128], index: 9, kind: output, shape index: {}]
  %s10 = sld [smem:[#allocation0]]
  $region46: #{_forward_impl.2} parent=0
    _
  %s12 = ssub.s32 1, %s10
  %s13 = scalar_select 0, %s12, %s10
  // Predicated region
  $region2: #{_forward_impl.2} parent=0 // pred_check
    _
  $region3: #{_forward_impl.2} parent=0 // pred_check_branch
    %15 = sbr.rel (0) target = $region5
  $region4: #{_forward_impl.2} parent=0 // pred_region
    _
  $region5: #{_forward_impl.2} parent=0 // pred_fallthru
    _
  // Predicated region
  $region6: #{_forward_impl.2} parent=0 // pred_check
    _
  $region7: #{_forward_impl.2} parent=0 // pred_check_branch
    %17 = sbr.rel (0) target = $region9
  $region8: #{_forward_impl.2} parent=0 // pred_region
    _
  $region9: #{_forward_impl.2} parent=0 // pred_fallthru
    _
  // Predicated region
  $region10: #{_forward_impl.2} parent=0 // pred_check
    _
  $region11: #{_forward_impl.2} parent=0 // pred_check_branch
    %19 = sbr.rel (0) target = $region13
  $region12: #{_forward_impl.2} parent=0 // pred_region
    _
  $region13: #{_forward_impl.2} parent=0 // pred_fallthru
    _
  // Predicated region
  $region14: #{_forward_impl.2} parent=0 // pred_check
    _
  $region15: #{_forward_impl.2} parent=0 // pred_check_branch
    %21 = sbr.rel (0) target = $region17
  $region16: #{_forward_impl.2} parent=0 // pred_region
    _
  $region17: #{_forward_impl.2} parent=0 // pred_fallthru
    _
  // Predicated region
  $region18: #{_forward_impl.2} parent=0 // pred_check
    _
  $region19: #{_forward_impl.2} parent=0 // pred_check_branch
    %23 = sbr.rel (0) target = $region21
  $region20: #{_forward_impl.2} parent=0 // pred_region
    _
  $region21: #{_forward_impl.2} parent=0 // pred_fallthru
    _
  // Predicated region
  $region22: #{_forward_impl.2} parent=0 // pred_check
    _
  $region23: #{_forward_impl.2} parent=0 // pred_check_branch
    %25 = sbr.rel (0) target = $region25
  $region24: #{_forward_impl.2} parent=0 // pred_region
    _
  $region25: #{_forward_impl.2} parent=0 // pred_fallthru
    _
  // Predicated region
  $region26: #{_forward_impl.2} parent=0 // pred_check
    _
  $region27: #{_forward_impl.2} parent=0 // pred_check_branch
    %27 = sbr.rel (0) target = $region29
  $region28: #{_forward_impl.2} parent=0 // pred_region
    _
  $region29: #{_forward_impl.2} parent=0 // pred_fallthru
    _
  // Predicated region
  $region30: #{_forward_impl.2} parent=0 // pred_check
    _
  $region31: #{_forward_impl.2} parent=0 // pred_check_branch
    %29 = sbr.rel (0) target = $region33
  $region32: #{_forward_impl.2} parent=0 // pred_region
    _
  $region33: #{_forward_impl.2} parent=0 // pred_fallthru
    _
  // Predicated region
  $region34: #{_forward_impl.2} parent=0 // pred_check
    _
  $region35: #{_forward_impl.2} parent=0 // pred_check_branch
    %31 = sbr.rel (0) target = $region37
  $region36: #{_forward_impl.2} parent=0 // pred_region
    _
  $region37: #{_forward_impl.2} parent=0 // pred_fallthru
    _
  %v33 = vld [vmem:[%s0] sm:$0xff]
  %v34 = vld [vmem:[%s0 + $0x8] sm:$0xff]
  %v35 = vld [vmem:[%s0 + $0x10] sm:$0xff]
  %v36 = vld [vmem:[%s0 + $0x18] sm:$0xff]
  %v37 = vpack.c.bf16 %v34, %v33
  %v38 = vpack.c.bf16 %v36, %v35
  %v39 = vld [vmem:[%s1] sm:$0xff]
  %v40 = vld [vmem:[%s1 + $0x8] sm:$0xff]
  %v41 = vld [vmem:[%s1 + $0x10] sm:$0xff]
  %v42 = vld [vmem:[%s1 + $0x18] sm:$0xff]
  %v43 = vld [vmem:[%s2] sm:$0x1]
  %v44 = vld [vmem:[%s3] sm:$0xff]
  %v45 = vld [vmem:[%s3 + $0x8] sm:$0xff]
  %v46 = vld [vmem:[%s3 + $0x10] sm:$0xff]
  %v47 = vld [vmem:[%s3 + $0x18] sm:$0xff]
  %v48 = vld [vmem:[%s4] sm:$0xff]
  %v49 = vld [vmem:[%s4 + $0x8] sm:$0xff]
  %v50 = vld [vmem:[%s4 + $0x10] sm:$0xff]
  %v51 = vld [vmem:[%s4 + $0x18] sm:$0xff]
  %v52 = vlaneseq
  %v53 = vand.u32 %v52, 127
  %54 = vset.pattern.permute.xlu0 0
  %55 = vperm.xlu0 %54, %v39
  %v56 = vpop.permute.xlu0 %55
  %57 = vset.pattern.permute.xlu0 0
  %58 = vperm.xlu0 %57, %v40
  %v59 = vpop.permute.xlu0 %58
  %60 = vset.pattern.permute.xlu0 0
  %61 = vperm.xlu0 %60, %v41
  %v62 = vpop.permute.xlu0 %61
  %63 = vset.pattern.permute.xlu0 0
  %64 = vperm.xlu0 %63, %v42
  %v65 = vpop.permute.xlu0 %64
  %vm66 = vcmp.eq.s32.totalorder %v53, %v56
  %vm67 = vcmp.eq.s32.totalorder %v53, %v59
  %vm68 = vcmp.eq.s32.totalorder %v53, %v62
  %vm69 = vcmp.eq.s32.totalorder %v53, %v65
  %v70 = vsel %vm66, 1.0, 0.0
  %v71 = vsel %vm67, 1.0, 0.0
  %v72 = vsel %vm68, 1.0, 0.0
  %v73 = vsel %vm69, 1.0, 0.0
  %v74 = vpack.c.bf16 %v71, %v70
  %v75 = vpack.c.bf16 %v73, %v72
  %v76 = vlaneseq
  %v77 = vshrl.u32 %v76, 7
  %v78 = vadd.s32 %v77, 8
  %v79 = vadd.s32 %v77, 16
  %v80 = vadd.s32 %v77, 24
  %v81 = vperm.slane %v43, 0
  %vm82 = vcmp.eq.s32.totalorder %v77, %v81
  %vm83 = vcmp.eq.s32.totalorder %v78, %v81
  %vm84 = vcmp.eq.s32.totalorder %v79, %v81
  %vm85 = vcmp.eq.s32.totalorder %v80, %v81
  %v86 = vsel %vm82, 1.0, 0.0
  %v87 = vsel %vm83, 1.0, 0.0
  %v88 = vsel %vm84, 1.0, 0.0
  %v89 = vsel %vm85, 1.0, 0.0
  %v90 = vpack.c.bf16 %v87, %v86
  %v91 = vpack.c.bf16 %v89, %v88
  %v92 = vld [vmem:[%s5] sm:$0xf]
  %v93 = vld [vmem:[%s5 + $0x4] sm:$0xf]
  %v94 = vld [vmem:[%s5 + $0x8] sm:$0xf]
  %v95 = vld [vmem:[%s5 + $0xc] sm:$0xf]
  %v96 = vld [vmem:[%s6] sm:$0x1]
  %v98 = vperm.slane %v96, 0
  %v104 = vunpack.c.l.b16 %v92
  %v105 = vunpack.c.l.b16 %v93
  %v106 = vunpack.c.l.b16 %v94
  %v107 = vunpack.c.l.b16 %v95
  %v108 = vpack.c.b16 %v105, %v104
  %v109 = vpack.c.b16 %v107, %v106
  %vm112 = vcmask 261120
  %v114 = vsel %vm112, %v37, 0
  %v117 = vsel %vm112, %v38, 0
  %119 = vmatpush.bf16.msra.mxu0 0
  %120 = vmatpush.bf16.msra.mxu0 0
  %121 = vmatpush.bf16.msra.mxu0 0
  %122 = vmatpush.bf16.msra.mxu0 0
  %123 = vmatpush.bf16.msra.mxu0 0
  %124 = vmatpush.bf16.msra.mxu0 0
  %125 = vmatpush.bf16.msra.mxu0 %v109
  %126 = vmatpush.bf16.msra.mxu0 %v108
  %127 = vmatmul.bf16.gmra.mxu0 %v114
  %v128 = vpop.f32.mrf.mxu0
  %v129 = vadd.f32 %v98, %v128
  %v130 = vpop.f32.mrf.mxu0
  %v131 = vadd.f32 %v98, %v130
  %132 = vmatmul.bf16.gmra.mxu0 %v117
  %v133 = vpop.f32.mrf.mxu0
  %v134 = vadd.f32 %v98, %v133
  %v135 = vpop.f32.mrf.mxu0
  %v136 = vadd.f32 %v98, %v135
  %137 = vdwg.mxu0
  %v138 = vpack.c.bf16 %v131, %v129
  %v139 = vpack.c.bf16 %v136, %v134
  %v140 = vld [vmem:[%s7] sm:$0xff]
  %v141 = vld [vmem:[%s7 + $0x8] sm:$0xff]
  %v142 = vld [vmem:[%s7 + $0x10] sm:$0xff]
  %v143 = vld [vmem:[%s7 + $0x18] sm:$0xff]
  %v145 = vsel %vm112, %v74, 0
  %v148 = vsel %vm112, %v75, 0
  %150 = vmatpush.bf16.msra.mxu0 0
  %151 = vmatpush.bf16.msra.mxu0 0
  %152 = vmatpush.bf16.msra.mxu0 0
  %153 = vmatpush.bf16.msra.mxu0 0
  %154 = vmatpush.bf16.msra.mxu0 0
  %155 = vmatpush.bf16.msra.mxu0 0
  %156 = vmatpush.bf16.msra.mxu0 %v139
  %157 = vmatpush.bf16.msra.mxu0 %v138
  %158 = vmatmul.bf16.gmra.mxu0 %v145
  %v159 = vpop.f32.mrf.mxu0
  %v160 = vadd.f32 %v140, %v159
  %v161 = vpop.f32.mrf.mxu0
  %v162 = vadd.f32 %v141, %v161
  %163 = vmatmul.bf16.gmra.mxu0 %v148
  %v164 = vpop.f32.mrf.mxu0
  %v165 = vadd.f32 %v142, %v164
  %v166 = vpop.f32.mrf.mxu0
  %v167 = vadd.f32 %v143, %v166
  %168 = vdwg.mxu0
  %v169 = vmax.f32 %v160, 0.0
  %v170 = vmax.f32 %v162, 0.0
  %v171 = vmax.f32 %v165, 0.0
  %v172 = vmax.f32 %v167, 0.0
  %174 = vset.pattern.permute.xlu0 0
  %175 = vperm.xlu0 %174, %v44
  %v176 = vpop.permute.xlu0 %175
  %179 = vset.pattern.permute.xlu0 0
  %180 = vperm.xlu0 %179, %v45
  %v181 = vpop.permute.xlu0 %180
  %184 = vset.pattern.permute.xlu0 0
  %185 = vperm.xlu0 %184, %v46
  %v186 = vpop.permute.xlu0 %185
  %189 = vset.pattern.permute.xlu0 0
  %190 = vperm.xlu0 %189, %v47
  %v191 = vpop.permute.xlu0 %190
  %v193 = vmul.f32 %v176, %v169
  %v194 = vmul.f32 %v181, %v170
  %v195 = vmul.f32 %v186, %v171
  %v196 = vmul.f32 %v191, %v172
  %v197 = vpack.c.bf16 %v194, %v193
  %v198 = vpack.c.bf16 %v196, %v195
  %v199 = vld [vmem:[%s8] sm:$0x1]
  %v201 = vperm.slane %v199, 0
  %v203 = vadd.f32 %v129, %v201
  %v204 = vadd.f32 %v131, %v201
  %v205 = vadd.f32 %v134, %v201
  %v206 = vadd.f32 %v136, %v201
  %v207 = vmax.f32 %v203, 0.0
  %v208 = vmax.f32 %v204, 0.0
  %v209 = vmax.f32 %v205, 0.0
  %v210 = vmax.f32 %v206, 0.0
  %212 = vset.pattern.permute.xlu0 0
  %213 = vperm.xlu0 %212, %v48
  %v214 = vpop.permute.xlu0 %213
  %217 = vset.pattern.permute.xlu0 0
  %218 = vperm.xlu0 %217, %v49
  %v219 = vpop.permute.xlu0 %218
  %222 = vset.pattern.permute.xlu0 0
  %223 = vperm.xlu0 %222, %v50
  %v224 = vpop.permute.xlu0 %223
  %227 = vset.pattern.permute.xlu0 0
  %228 = vperm.xlu0 %227, %v51
  %v229 = vpop.permute.xlu0 %228
  %v231 = vmul.f32 %v207, %v214
  %v232 = vmul.f32 %v208, %v219
  %v233 = vmul.f32 %v209, %v224
  %v234 = vmul.f32 %v210, %v229
  %v236 = vsel %vm112, %v90, 0
  %v239 = vsel %vm112, %v91, 0
  %241 = vmatpush.bf16.msra.mxu0 0
  %242 = vmatpush.bf16.msra.mxu0 0
  %243 = vmatpush.bf16.msra.mxu0 0
  %244 = vmatpush.bf16.msra.mxu0 0
  %245 = vmatpush.bf16.msra.mxu0 0
  %246 = vmatpush.bf16.msra.mxu0 0
  %247 = vmatpush.bf16.msra.mxu0 %v198
  %248 = vmatpush.bf16.msra.mxu0 %v197
  %249 = vmatmul.bf16.gmra.mxu0 %v236
  %v250 = vpop.f32.mrf.mxu0
  %v251 = vadd.f32 %v231, %v250
  %v252 = vpop.f32.mrf.mxu0
  %v253 = vadd.f32 %v232, %v252
  %254 = vmatmul.bf16.gmra.mxu0 %v239
  %v255 = vpop.f32.mrf.mxu0
  %v256 = vadd.f32 %v233, %v255
  %v257 = vpop.f32.mrf.mxu0
  %v258 = vadd.f32 %v234, %v257
  %259 = vdwg.mxu0
  %v260 = vmax.f32 %v251, 0.0
  %v261 = vmax.f32 %v253, 0.0
  %v262 = vmax.f32 %v256, 0.0
  %v263 = vmax.f32 %v258, 0.0
  %v264 = vpack.c.bf16 %v261, %v260
  %v265 = vpack.c.bf16 %v263, %v262
  %s266 = scalar_lea.vmem %s5, 16
  %v267 = vld [vmem:[%s266] sm:$0xf]
  %v268 = vld [vmem:[%s266 + $0x4] sm:$0xf]
  %v269 = vld [vmem:[%s266 + $0x8] sm:$0xf]
  %v270 = vld [vmem:[%s266 + $0xc] sm:$0xf]
  %s271 = scalar_lea.vmem %s6, 1
  %v272 = vld [vmem:[%s271] sm:$0x1]
  %v274 = vperm.slane %v272, 0
  %v280 = vunpack.c.l.b16 %v267
  %v281 = vunpack.c.l.b16 %v268
  %v282 = vunpack.c.l.b16 %v269
  %v283 = vunpack.c.l.b16 %v270
  %v284 = vpack.c.b16 %v281, %v280
  %v285 = vpack.c.b16 %v283, %v282
  %v289 = vsel %vm112, %v264, 0
  %v292 = vsel %vm112, %v265, 0
  %294 = vmatpush.bf16.msra.mxu0 0
  %295 = vmatpush.bf16.msra.mxu0 0
  %296 = vmatpush.bf16.msra.mxu0 0
  %297 = vmatpush.bf16.msra.mxu0 0
  %298 = vmatpush.bf16.msra.mxu0 0
  %299 = vmatpush.bf16.msra.mxu0 0
  %300 = vmatpush.bf16.msra.mxu0 %v285
  %301 = vmatpush.bf16.msra.mxu0 %v284
  %302 = vmatmul.bf16.gmra.mxu0 %v289
  %v303 = vpop.f32.mrf.mxu0
  %v304 = vadd.f32 %v274, %v303
  %v305 = vpop.f32.mrf.mxu0
  %v306 = vadd.f32 %v274, %v305
  %307 = vmatmul.bf16.gmra.mxu0 %v292
  %v308 = vpop.f32.mrf.mxu0
  %v309 = vadd.f32 %v274, %v308
  %v310 = vpop.f32.mrf.mxu0
  %v311 = vadd.f32 %v274, %v310
  %312 = vdwg.mxu0
  %v313 = vpack.c.bf16 %v306, %v304
  %v314 = vpack.c.bf16 %v311, %v309
  %s315 = scalar_lea.vmem %s7, 32
  %v316 = vld [vmem:[%s315] sm:$0xff]
  %v317 = vld [vmem:[%s315 + $0x8] sm:$0xff]
  %v318 = vld [vmem:[%s315 + $0x10] sm:$0xff]
  %v319 = vld [vmem:[%s315 + $0x18] sm:$0xff]
  %320 = vmatpush.bf16.msra.mxu0 0
  %321 = vmatpush.bf16.msra.mxu0 0
  %322 = vmatpush.bf16.msra.mxu0 0
  %323 = vmatpush.bf16.msra.mxu0 0
  %324 = vmatpush.bf16.msra.mxu0 0
  %325 = vmatpush.bf16.msra.mxu0 0
  %326 = vmatpush.bf16.msra.mxu0 %v314
  %327 = vmatpush.bf16.msra.mxu0 %v313
  %328 = vmatmul.bf16.gmra.mxu0 %v145
  %v329 = vpop.f32.mrf.mxu0
  %v330 = vadd.f32 %v316, %v329
  %v331 = vpop.f32.mrf.mxu0
  %v332 = vadd.f32 %v317, %v331
  %333 = vmatmul.bf16.gmra.mxu0 %v148
  %v334 = vpop.f32.mrf.mxu0
  %v335 = vadd.f32 %v318, %v334
  %v336 = vpop.f32.mrf.mxu0
  %v337 = vadd.f32 %v319, %v336
  %338 = vdwg.mxu0
  %v339 = vmax.f32 %v330, 0.0
  %v340 = vmax.f32 %v332, 0.0
  %v341 = vmax.f32 %v335, 0.0
  %v342 = vmax.f32 %v337, 0.0
  %v343 = vmul.f32 %v176, %v339
  %v344 = vmul.f32 %v181, %v340
  %v345 = vmul.f32 %v186, %v341
  %v346 = vmul.f32 %v191, %v342
  %v347 = vpack.c.bf16 %v344, %v343
  %v348 = vpack.c.bf16 %v346, %v345
  %s349 = scalar_lea.vmem %s8, 1
  %v350 = vld [vmem:[%s349] sm:$0x1]
  %v352 = vperm.slane %v350, 0
  %v354 = vadd.f32 %v304, %v352
  %v355 = vadd.f32 %v306, %v352
  %v356 = vadd.f32 %v309, %v352
  %v357 = vadd.f32 %v311, %v352
  %v358 = vmax.f32 %v354, 0.0
  %v359 = vmax.f32 %v355, 0.0
  %v360 = vmax.f32 %v356, 0.0
  %v361 = vmax.f32 %v357, 0.0
  %v362 = vmul.f32 %v358, %v214
  %v363 = vmul.f32 %v359, %v219
  %v364 = vmul.f32 %v360, %v224
  %v365 = vmul.f32 %v361, %v229
  %366 = vmatpush.bf16.msra.mxu0 0
  %367 = vmatpush.bf16.msra.mxu0 0
  %368 = vmatpush.bf16.msra.mxu0 0
  %369 = vmatpush.bf16.msra.mxu0 0
  %370 = vmatpush.bf16.msra.mxu0 0
  %371 = vmatpush.bf16.msra.mxu0 0
  %372 = vmatpush.bf16.msra.mxu0 %v348
  %373 = vmatpush.bf16.msra.mxu0 %v347
  %374 = vmatmul.bf16.gmra.mxu0 %v236
  %v375 = vpop.f32.mrf.mxu0
  %v376 = vadd.f32 %v362, %v375
  %v377 = vpop.f32.mrf.mxu0
  %v378 = vadd.f32 %v363, %v377
  %379 = vmatmul.bf16.gmra.mxu0 %v239
  %v380 = vpop.f32.mrf.mxu0
  %v381 = vadd.f32 %v364, %v380
  %v382 = vpop.f32.mrf.mxu0
  %v383 = vadd.f32 %v365, %v382
  %384 = vdwg.mxu0
  %v385 = vmax.f32 %v376, 0.0
  %v386 = vmax.f32 %v378, 0.0
  %v387 = vmax.f32 %v381, 0.0
  %v388 = vmax.f32 %v383, 0.0
  %393 = vrot.lane.b32.xlu0 %v385, 32
  %v394 = vpop.permute.xlu0 %393
  %395 = vrot.lane.b32.xlu0 %v386, 32
  %v396 = vpop.permute.xlu0 %395
  %397 = vrot.lane.b32.xlu0 %v387, 32
  %v398 = vpop.permute.xlu0 %397
  %399 = vrot.lane.b32.xlu0 %v388, 32
  %v400 = vpop.permute.xlu0 %399
  %v405 = vsel %vm112, %v260, %v394
  %v406 = vsel %vm112, %v261, %v396
  %v407 = vsel %vm112, %v262, %v398
  %v408 = vsel %vm112, %v263, %v400
  %vm409 = vcmask 523264
  %v410 = vsel %vm409, %v405, 0.0
  %v411 = vsel %vm409, %v406, 0.0
  %v412 = vsel %vm409, %v407, 0.0
  %v413 = vsel %vm409, %v408, 0.0
  %v414 = vpack.c.bf16 %v410, %v410
  %v415 = vpack.c.bf16 %v411, %v411
  %v416 = vpack.c.bf16 %v412, %v412
  %v417 = vpack.c.bf16 %v413, %v413
  %418 = vst [vmem:[%s9] sm:$0xf] %v414
  %419 = vst [vmem:[%s9 + $0x4] sm:$0xf] %v415
  %420 = vst [vmem:[%s9 + $0x8] sm:$0xf] %v416
  %421 = vst [vmem:[%s9 + $0xc] sm:$0xf] %v417
  // Predicated region
  $region38: #{_forward_impl.2} parent=0 // pred_check
    _
  $region39: #{_forward_impl.2} parent=0 // pred_check_branch
    %423 = sbr.rel (0) target = $region41
  $region40: #{_forward_impl.2} parent=0 // pred_region
    _
  $region41: #{_forward_impl.2} parent=0 // pred_fallthru
    _
  // Predicated region
  $region42: #{_forward_impl.2} parent=0 // pred_check
    _
  $region43: #{_forward_impl.2} parent=0 // pred_check_branch
    %425 = sbr.rel (0) target = $region45
  $region44: #{_forward_impl.2} parent=0 // pred_region
    _
  $region45: #{_forward_impl.2} parent=0 // pred_fallthru
    _

// kernel: _forward_impl.3
$region0: #{_forward_impl.3}
  #allocation0 [shape = 'u32[]', space=smem, size = 0x4, offset = 0x4, fixed_abs, tag = 'smem constant byte address 0x4 - core index']
  #allocation1 [shape = 'u32[72,128]{1,0:T(1,128)}', space=vmem, size = 0x9000, scoped, tag = 'internal scratch']
  %s0 = inlined_call_operand.smem [shape: u32[33], index: -1, kind: input, shape index: {}]
  %s1 = sld [smem:[%s0]]
  %s2 = scalar_lea.smem %s0, 1
  %s3 = sld [smem:[%s2]]
  %s4 = scalar_lea.smem %s0, 2
  %s5 = sld [smem:[%s4]]
  %s6 = scalar_lea.smem %s0, 3
  %s7 = sld [smem:[%s6]]
  %s8 = scalar_lea.smem %s0, 4
  %s9 = sld [smem:[%s8]]
  %s10 = scalar_lea.smem %s0, 5
  %s11 = sld [smem:[%s10]]
  %s12 = scalar_lea.smem %s0, 6
  %s13 = sld [smem:[%s12]]
  %s14 = scalar_lea.smem %s0, 7
  %s15 = sld [smem:[%s14]]
  %s16 = scalar_lea.smem %s0, 8
  %s17 = sld [smem:[%s16]]
  %s18 = scalar_lea.smem %s0, 9
  %s19 = sld [smem:[%s18]]
  %s20 = scalar_lea.smem %s0, 10
  %s21 = sld [smem:[%s20]]
  %s22 = scalar_lea.smem %s0, 11
  %s23 = sld [smem:[%s22]]
  %s24 = scalar_lea.smem %s0, 12
  %s25 = sld [smem:[%s24]]
  %s26 = scalar_lea.smem %s0, 13
  %s27 = sld [smem:[%s26]]
  %s28 = scalar_lea.smem %s0, 14
  %s29 = sld [smem:[%s28]]
  %s30 = scalar_lea.smem %s0, 15
  %s31 = sld [smem:[%s30]]
  %s32 = scalar_lea.smem %s0, 16
  %s33 = sld [smem:[%s32]]
  %s34 = scalar_lea.smem %s0, 17
  %s35 = sld [smem:[%s34]]
  %s36 = scalar_lea.smem %s0, 18
  %s37 = sld [smem:[%s36]]
  %s38 = scalar_lea.smem %s0, 19
  %s39 = sld [smem:[%s38]]
  %s40 = scalar_lea.smem %s0, 20
  %s41 = sld [smem:[%s40]]
  %s42 = scalar_lea.smem %s0, 21
  %s43 = sld [smem:[%s42]]
  %s44 = scalar_lea.smem %s0, 22
  %s45 = sld [smem:[%s44]]
  %s46 = scalar_lea.smem %s0, 23
  %s47 = sld [smem:[%s46]]
  %s48 = scalar_lea.smem %s0, 24
  %s49 = sld [smem:[%s48]]
  %s50 = scalar_lea.smem %s0, 25
  %s51 = sld [smem:[%s50]]
  %s52 = scalar_lea.smem %s0, 26
  %s53 = sld [smem:[%s52]]
  %s54 = scalar_lea.smem %s0, 27
  %s55 = sld [smem:[%s54]]
  %s56 = scalar_lea.smem %s0, 28
  %s57 = sld [smem:[%s56]]
  %s58 = scalar_lea.smem %s0, 29
  %s59 = sld [smem:[%s58]]
  %s60 = scalar_lea.smem %s0, 30
  %s61 = sld [smem:[%s60]]
  %s62 = scalar_lea.smem %s0, 31
  %s63 = sld [smem:[%s62]]
  %s64 = scalar_lea.smem %s0, 32
  %s65 = sld [smem:[%s64]]
  %s66 = sld [smem:[#allocation0]]
  $region138: #{_forward_impl.3} parent=0
    _
  %s68 = ssub.s32 1, %s66
  %s69 = scalar_select 0, %s68, %s66
  $region1: #{_forward_impl.3} parent=0
    #allocation2 [shape = 'u8[1024]{0}', space=vmem, size = 0x400, scoped, tag = 'output window, operand 0, single buffered']
    #allocation3 [shape = 's32[1]{0}', space=sflag, size = 0x4, scoped, tag = 'scoped memory for _forward_impl.3']
    %70 = vsyncpa [#allocation3], 0
    // Predicated region
    $region2: #{_forward_impl.3} parent=1 // pred_check
      _
    $region3: #{_forward_impl.3} parent=1 // pred_check_branch
      %72 = sbr.rel (0) target = $region5
    $region4: #{_forward_impl.3} parent=1 // pred_region
      _
    $region5: #{_forward_impl.3} parent=1 // pred_fallthru
      _
    // Predicated region
    $region6: #{_forward_impl.3} parent=1 // pred_check
      _
    $region7: #{_forward_impl.3} parent=1 // pred_check_branch
      %74 = sbr.rel (0) target = $region9
    $region8: #{_forward_impl.3} parent=1 // pred_region
      _
    $region9: #{_forward_impl.3} parent=1 // pred_fallthru
      _
    // Predicated region
    $region10: #{_forward_impl.3} parent=1 // pred_check
      _
    $region11: #{_forward_impl.3} parent=1 // pred_check_branch
      %76 = sbr.rel (0) target = $region13
    $region12: #{_forward_impl.3} parent=1 // pred_region
      _
    $region13: #{_forward_impl.3} parent=1 // pred_fallthru
      _
    // Predicated region
    $region14: #{_forward_impl.3} parent=1 // pred_check
      _
    $region15: #{_forward_impl.3} parent=1 // pred_check_branch
      %78 = sbr.rel (0) target = $region17
    $region16: #{_forward_impl.3} parent=1 // pred_region
      _
    $region17: #{_forward_impl.3} parent=1 // pred_fallthru
      _
    // Predicated region
    $region18: #{_forward_impl.3} parent=1 // pred_check
      _
    $region19: #{_forward_impl.3} parent=1 // pred_check_branch
      %80 = sbr.rel (0) target = $region21
    $region20: #{_forward_impl.3} parent=1 // pred_region
      _
    $region21: #{_forward_impl.3} parent=1 // pred_fallthru
      _
    // Predicated region
    $region22: #{_forward_impl.3} parent=1 // pred_check
      _
    $region23: #{_forward_impl.3} parent=1 // pred_check_branch
      %82 = sbr.rel (0) target = $region25
    $region24: #{_forward_impl.3} parent=1 // pred_region
      _
    $region25: #{_forward_impl.3} parent=1 // pred_fallthru
      _
    // Predicated region
    $region26: #{_forward_impl.3} parent=1 // pred_check
      _
    $region27: #{_forward_impl.3} parent=1 // pred_check_branch
      %84 = sbr.rel (0) target = $region29
    $region28: #{_forward_impl.3} parent=1 // pred_region
      _
    $region29: #{_forward_impl.3} parent=1 // pred_fallthru
      _
    // Predicated region
    $region30: #{_forward_impl.3} parent=1 // pred_check
      _
    $region31: #{_forward_impl.3} parent=1 // pred_check_branch
      %86 = sbr.rel (0) target = $region33
    $region32: #{_forward_impl.3} parent=1 // pred_region
      _
    $region33: #{_forward_impl.3} parent=1 // pred_fallthru
      _
    // Predicated region
    $region34: #{_forward_impl.3} parent=1 // pred_check
      _
    $region35: #{_forward_impl.3} parent=1 // pred_check_branch
      %88 = sbr.rel (0) target = $region37
    $region36: #{_forward_impl.3} parent=1 // pred_region
      _
    $region37: #{_forward_impl.3} parent=1 // pred_fallthru
      _
    // Predicated region
    $region38: #{_forward_impl.3} parent=1 // pred_check
      _
    $region39: #{_forward_impl.3} parent=1 // pred_check_branch
      %90 = sbr.rel (0) target = $region41
    $region40: #{_forward_impl.3} parent=1 // pred_region
      _
    $region41: #{_forward_impl.3} parent=1 // pred_fallthru
      _
    // Predicated region
    $region42: #{_forward_impl.3} parent=1 // pred_check
      _
    $region43: #{_forward_impl.3} parent=1 // pred_check_branch
      %92 = sbr.rel (0) target = $region45
    $region44: #{_forward_impl.3} parent=1 // pred_region
      _
    $region45: #{_forward_impl.3} parent=1 // pred_fallthru
      _
    // Predicated region
    $region46: #{_forward_impl.3} parent=1 // pred_check
      _
    $region47: #{_forward_impl.3} parent=1 // pred_check_branch
      %94 = sbr.rel (0) target = $region49
    $region48: #{_forward_impl.3} parent=1 // pred_region
      _
    $region49: #{_forward_impl.3} parent=1 // pred_fallthru
      _
    // Predicated region
    $region50: #{_forward_impl.3} parent=1 // pred_check
      _
    $region51: #{_forward_impl.3} parent=1 // pred_check_branch
      %96 = sbr.rel (0) target = $region53
    $region52: #{_forward_impl.3} parent=1 // pred_region
      _
    $region53: #{_forward_impl.3} parent=1 // pred_fallthru
      _
    // Predicated region
    $region54: #{_forward_impl.3} parent=1 // pred_check
      _
    $region55: #{_forward_impl.3} parent=1 // pred_check_branch
      %98 = sbr.rel (0) target = $region57
    $region56: #{_forward_impl.3} parent=1 // pred_region
      _
    $region57: #{_forward_impl.3} parent=1 // pred_fallthru
      _
    // Predicated region
    $region58: #{_forward_impl.3} parent=1 // pred_check
      _
    $region59: #{_forward_impl.3} parent=1 // pred_check_branch
      %100 = sbr.rel (0) target = $region61
    $region60: #{_forward_impl.3} parent=1 // pred_region
      _
    $region61: #{_forward_impl.3} parent=1 // pred_fallthru
      _
    // Predicated region
    $region62: #{_forward_impl.3} parent=1 // pred_check
      _
    $region63: #{_forward_impl.3} parent=1 // pred_check_branch
      %102 = sbr.rel (0) target = $region65
    $region64: #{_forward_impl.3} parent=1 // pred_region
      _
    $region65: #{_forward_impl.3} parent=1 // pred_fallthru
      _
    // Predicated region
    $region66: #{_forward_impl.3} parent=1 // pred_check
      _
    $region67: #{_forward_impl.3} parent=1 // pred_check_branch
      %104 = sbr.rel (0) target = $region69
    $region68: #{_forward_impl.3} parent=1 // pred_region
      _
    $region69: #{_forward_impl.3} parent=1 // pred_fallthru
      _
    // Predicated region
    $region70: #{_forward_impl.3} parent=1 // pred_check
      _
    $region71: #{_forward_impl.3} parent=1 // pred_check_branch
      %106 = sbr.rel (0) target = $region73
    $region72: #{_forward_impl.3} parent=1 // pred_region
      _
    $region73: #{_forward_impl.3} parent=1 // pred_fallthru
      _
    // Predicated region
    $region74: #{_forward_impl.3} parent=1 // pred_check
      _
    $region75: #{_forward_impl.3} parent=1 // pred_check_branch
      %108 = sbr.rel (0) target = $region77
    $region76: #{_forward_impl.3} parent=1 // pred_region
      _
    $region77: #{_forward_impl.3} parent=1 // pred_fallthru
      _
    // Predicated region
    $region78: #{_forward_impl.3} parent=1 // pred_check
      _
    $region79: #{_forward_impl.3} parent=1 // pred_check_branch
      %110 = sbr.rel (0) target = $region81
    $region80: #{_forward_impl.3} parent=1 // pred_region
      _
    $region81: #{_forward_impl.3} parent=1 // pred_fallthru
      _
    // Predicated region
    $region82: #{_forward_impl.3} parent=1 // pred_check
      _
    $region83: #{_forward_impl.3} parent=1 // pred_check_branch
      %112 = sbr.rel (0) target = $region85
    $region84: #{_forward_impl.3} parent=1 // pred_region
      _
    $region85: #{_forward_impl.3} parent=1 // pred_fallthru
      _
    // Predicated region
    $region86: #{_forward_impl.3} parent=1 // pred_check
      _
    $region87: #{_forward_impl.3} parent=1 // pred_check_branch
      %114 = sbr.rel (0) target = $region89
    $region88: #{_forward_impl.3} parent=1 // pred_region
      _
    $region89: #{_forward_impl.3} parent=1 // pred_fallthru
      _
    // Predicated region
    $region90: #{_forward_impl.3} parent=1 // pred_check
      _
    $region91: #{_forward_impl.3} parent=1 // pred_check_branch
      %116 = sbr.rel (0) target = $region93
    $region92: #{_forward_impl.3} parent=1 // pred_region
      _
    $region93: #{_forward_impl.3} parent=1 // pred_fallthru
      _
    // Predicated region
    $region94: #{_forward_impl.3} parent=1 // pred_check
      _
    $region95: #{_forward_impl.3} parent=1 // pred_check_branch
      %118 = sbr.rel (0) target = $region97
    $region96: #{_forward_impl.3} parent=1 // pred_region
      _
    $region97: #{_forward_impl.3} parent=1 // pred_fallthru
      _
    // Predicated region
    $region98: #{_forward_impl.3} parent=1 // pred_check
      _
    $region99: #{_forward_impl.3} parent=1 // pred_check_branch
      %120 = sbr.rel (0) target = $region101
    $region100: #{_forward_impl.3} parent=1 // pred_region
      _
    $region101: #{_forward_impl.3} parent=1 // pred_fallthru
      _
    // Predicated region
    $region102: #{_forward_impl.3} parent=1 // pred_check
      _
    $region103: #{_forward_impl.3} parent=1 // pred_check_branch
      %122 = sbr.rel (0) target = $region105
    $region104: #{_forward_impl.3} parent=1 // pred_region
      _
    $region105: #{_forward_impl.3} parent=1 // pred_fallthru
      _
    // Predicated region
    $region106: #{_forward_impl.3} parent=1 // pred_check
      _
    $region107: #{_forward_impl.3} parent=1 // pred_check_branch
      %124 = sbr.rel (0) target = $region109
    $region108: #{_forward_impl.3} parent=1 // pred_region
      _
    $region109: #{_forward_impl.3} parent=1 // pred_fallthru
      _
    // Predicated region
    $region110: #{_forward_impl.3} parent=1 // pred_check
      _
    $region111: #{_forward_impl.3} parent=1 // pred_check_branch
      %126 = sbr.rel (0) target = $region113
    $region112: #{_forward_impl.3} parent=1 // pred_region
      _
    $region113: #{_forward_impl.3} parent=1 // pred_fallthru
      _
    // Predicated region
    $region114: #{_forward_impl.3} parent=1 // pred_check
      _
    $region115: #{_forward_impl.3} parent=1 // pred_check_branch
      %128 = sbr.rel (0) target = $region117
    $region116: #{_forward_impl.3} parent=1 // pred_region
      _
    $region117: #{_forward_impl.3} parent=1 // pred_fallthru
      _
    // Predicated region
    $region118: #{_forward_impl.3} parent=1 // pred_check
      _
    $region119: #{_forward_impl.3} parent=1 // pred_check_branch
      %130 = sbr.rel (0) target = $region121
    $region120: #{_forward_impl.3} parent=1 // pred_region
      _
    $region121: #{_forward_impl.3} parent=1 // pred_fallthru
      _
    // Predicated region
    $region122: #{_forward_impl.3} parent=1 // pred_check
      _
    $region123: #{_forward_impl.3} parent=1 // pred_check_branch
      %132 = sbr.rel (0) target = $region125
    $region124: #{_forward_impl.3} parent=1 // pred_region
      _
    $region125: #{_forward_impl.3} parent=1 // pred_fallthru
      _
    // Predicated region
    $region126: #{_forward_impl.3} parent=1 // pred_check
      _
    $region127: #{_forward_impl.3} parent=1 // pred_check_branch
      %134 = sbr.rel (0) target = $region129
    $region128: #{_forward_impl.3} parent=1 // pred_region
      _
    $region129: #{_forward_impl.3} parent=1 // pred_fallthru
      _
    %v136 = vld [vmem:[%s1] sm:$0xf]
    %v137 = vld [vmem:[%s1 + $0x4] sm:$0xf]
    %v138 = vld [vmem:[%s1 + $0x8] sm:$0xf]
    %v139 = vld [vmem:[%s1 + $0xc] sm:$0xf]
    %v140 = vld [vmem:[%s3] sm:$0x3]
    %v141 = vld [vmem:[%s5] sm:$0xff]
    %v142 = vld [vmem:[%s7] sm:$0x3]
    %v143 = vld [vmem:[%s9] sm:$0x3]
    %v144 = vld [vmem:[%s11] sm:$0xf]
    %v145 = vld [vmem:[%s11 + $0x4] sm:$0xf]
    %v146 = vld [vmem:[%s11 + $0x8] sm:$0xf]
    %v147 = vld [vmem:[%s11 + $0xc] sm:$0xf]
    %v148 = vld [vmem:[%s11 + $0x10] sm:$0xf]
    %v149 = vld [vmem:[%s11 + $0x14] sm:$0xf]
    %v150 = vld [vmem:[%s11 + $0x18] sm:$0xf]
    %v151 = vld [vmem:[%s11 + $0x1c] sm:$0xf]
    %v152 = vld [vmem:[%s13] sm:$0x1]
    %v154 = vperm.slane %v152, 0
    %v164 = vunpack.c.l.b16 %v144
    %v165 = vunpack.c.l.b16 %v145
    %v166 = vunpack.c.l.b16 %v146
    %v167 = vunpack.c.l.b16 %v147
    %v168 = vunpack.c.l.b16 %v148
    %v169 = vunpack.c.l.b16 %v149
    %v170 = vunpack.c.l.b16 %v150
    %v171 = vunpack.c.l.b16 %v151
    %v172 = vpack.c.b16 %v165, %v164
    %v173 = vpack.c.b16 %v167, %v166
    %v174 = vpack.c.b16 %v169, %v168
    %v175 = vpack.c.b16 %v171, %v170
    %vm180 = vcmask 523264
    %v182 = vsel %vm180, %v143, 0
    %184 = vmatpush.bf16.msra.mxu0 0
    %185 = vmatpush.bf16.msra.mxu0 0
    %186 = vmatpush.bf16.msra.mxu0 0
    %187 = vmatpush.bf16.msra.mxu0 0
    %188 = vmatpush.bf16.msra.mxu0 %v175
    %189 = vmatpush.bf16.msra.mxu0 %v174
    %190 = vmatpush.bf16.msra.mxu0 %v173
    %191 = vmatpush.bf16.msra.mxu0 %v172
    %192 = vmatmul.bf16.gmra.mxu0 %v182
    %v193 = vpop.f32.mrf.mxu0
    %v194 = vadd.f32 %v154, %v193
    %v195 = vpop.f32.mrf.mxu0
    %196 = vdwg.mxu0
    %v197 = vld [vmem:[%s35] sm:$0x1]
    %v198 = vld [vmem:[%s37] sm:$0xf]
    %v199 = vld [vmem:[%s37 + $0x4] sm:$0xf]
    %v200 = vld [vmem:[%s37 + $0x8] sm:$0xf]
    %v201 = vld [vmem:[%s37 + $0xc] sm:$0xf]
    %v202 = vld [vmem:[%s39] sm:$0x1]
    %v207 = vunpack.c.l.b16 %v198
    %v208 = vunpack.c.l.b16 %v199
    %v209 = vunpack.c.l.b16 %v200
    %v210 = vunpack.c.l.b16 %v201
    %v211 = vpack.c.b16 %v208, %v207
    %v212 = vpack.c.b16 %v210, %v209
    %vm215 = vcmask 261120
    %v217 = vsel %vm215, %v197, 0
    %219 = vmatpush.bf16.msra.mxu0 0
    %220 = vmatpush.bf16.msra.mxu0 0
    %221 = vmatpush.bf16.msra.mxu0 0
    %222 = vmatpush.bf16.msra.mxu0 0
    %223 = vmatpush.bf16.msra.mxu0 0
    %224 = vmatpush.bf16.msra.mxu0 0
    %225 = vmatpush.bf16.msra.mxu0 %v212
    %226 = vmatpush.bf16.msra.mxu0 %v211
    %227 = vmatmul.bf16.gmra.mxu0 %v217
    %v228 = vpop.f32.mrf.mxu0
    %v229 = vadd.f32 %v202, %v228
    %v230 = vpop.f32.mrf.mxu0
    %231 = vdwg.mxu0
    %v232 = vld [vmem:[%s15] sm:$0xf]
    %v233 = vld [vmem:[%s15 + $0x4] sm:$0xf]
    %v234 = vld [vmem:[%s15 + $0x8] sm:$0xf]
    %v235 = vld [vmem:[%s15 + $0xc] sm:$0xf]
    %v236 = vld [vmem:[%s15 + $0x10] sm:$0xf]
    %v237 = vld [vmem:[%s15 + $0x14] sm:$0xf]
    %v238 = vld [vmem:[%s15 + $0x18] sm:$0xf]
    %v239 = vld [vmem:[%s15 + $0x1c] sm:$0xf]
    %v240 = vld [vmem:[%s15 + $0x20] sm:$0xf]
    %v241 = vld [vmem:[%s15 + $0x24] sm:$0xf]
    %v242 = vld [vmem:[%s15 + $0x28] sm:$0xf]
    %v243 = vld [vmem:[%s15 + $0x2c] sm:$0xf]
    %v244 = vld [vmem:[%s15 + $0x30] sm:$0xf]
    %v245 = vld [vmem:[%s15 + $0x34] sm:$0xf]
    %v246 = vld [vmem:[%s15 + $0x38] sm:$0xf]
    %v247 = vld [vmem:[%s15 + $0x3c] sm:$0xf]
    %v248 = vld [vmem:[%s17] sm:$0x1]
    %v250 = vperm.slane %v248, 0
    %v256 = vunpack.c.l.b16 %v136
    %v257 = vunpack.c.l.b16 %v137
    %v258 = vunpack.c.l.b16 %v138
    %v259 = vunpack.c.l.b16 %v139
    %v260 = vpack.c.b16 %v257, %v256
    %v261 = vpack.c.b16 %v259, %v258
    %v280 = vunpack.c.l.b16 %v232
    %v281 = vunpack.c.l.b16 %v233
    %v282 = vunpack.c.l.b16 %v234
    %v283 = vunpack.c.l.b16 %v235
    %v284 = vunpack.c.l.b16 %v236
    %v285 = vunpack.c.l.b16 %v237
    %v286 = vunpack.c.l.b16 %v238
    %v287 = vunpack.c.l.b16 %v239
    %v288 = vunpack.c.l.b16 %v240
    %v289 = vunpack.c.l.b16 %v241
    %v290 = vunpack.c.l.b16 %v242
    %v291 = vunpack.c.l.b16 %v243
    %v292 = vunpack.c.l.b16 %v244
    %v293 = vunpack.c.l.b16 %v245
    %v294 = vunpack.c.l.b16 %v246
    %v295 = vunpack.c.l.b16 %v247
    %v296 = vpack.c.b16 %v281, %v280
    %v297 = vpack.c.b16 %v283, %v282
    %v298 = vpack.c.b16 %v285, %v284
    %v299 = vpack.c.b16 %v287, %v286
    %v300 = vpack.c.b16 %v289, %v288
    %v301 = vpack.c.b16 %v291, %v290
    %v302 = vpack.c.b16 %v293, %v292
    %v303 = vpack.c.b16 %v295, %v294
    %312 = vmatpush.bf16.msra.mxu0 %v303
    %313 = vmatpush.bf16.msra.mxu0 %v302
    %314 = vmatpush.bf16.msra.mxu0 %v301
    %315 = vmatpush.bf16.msra.mxu0 %v300
    %316 = vmatpush.bf16.msra.mxu0 %v299
    %317 = vmatpush.bf16.msra.mxu0 %v298
    %318 = vmatpush.bf16.msra.mxu0 %v297
    %319 = vmatpush.bf16.msra.mxu0 %v296
    %320 = vmatmul.bf16.gmra.mxu0 %v260
    %v321 = vpop.f32.mrf.mxu0
    %v322 = vadd.f32 %v250, %v321
    %v323 = vpop.f32.mrf.mxu0
    %v324 = vadd.f32 %v250, %v323
    %325 = vmatmul.bf16.gmra.mxu0 %v261
    %v326 = vpop.f32.mrf.mxu0
    %v327 = vadd.f32 %v250, %v326
    %v328 = vpop.f32.mrf.mxu0
    %v329 = vadd.f32 %v250, %v328
    %330 = vdwg.mxu0
    %v331 = vpack.c.bf16 %v324, %v322
    %v332 = vpack.c.bf16 %v194, %v194
    %v333 = vperm.slane %v140, 0
    %v335 = vsel %vm215, %v332, 0
    %v338 = vsel %vm215, %v331, 0
    %340 = vmatpush.bf16.xpose.msra.mxu0 0
    %341 = vmatpush.bf16.xpose.msra.mxu0 0
    %342 = vmatpush.bf16.xpose.msra.mxu0 0
    %343 = vmatpush.bf16.xpose.msra.mxu0 0
    %344 = vmatpush.bf16.xpose.msra.mxu0 0
    %345 = vmatpush.bf16.xpose.msra.mxu0 0
    %346 = vmatpush.bf16.xpose.msra.mxu0 0
    %347 = vmatpush.bf16.xpose.msra.mxu0 %v338
    %348 = vmatmul.bf16.gmra.mxu0 %v335
    %v349 = vpop.f32.mrf.mxu0
    %v350 = vadd.f32 %v333, %v349
    %v351 = vpop.f32.mrf.mxu0
    %352 = vdwg.mxu0
    %vm353 = vcmask 125952
    %v354 = vsel %vm353, %v350, -inf
    %355 = vmax.xlane.f32.xlu0 %v354
    %v356 = vpop.xlane.xlu0 %355
    %v357 = vsub.f32 %v350, %v356
    %v358 = vmul.f32 %v357, 1.442695
    %v359 = vpow.pop %v358
    %v360 = vsel %vm353, %v359, 0.0
    %361 = vadd.xlane.f32.xlu0 %v360
    %v362 = vpop.xlane.xlu0 %361
    %v363 = vrcp.pop %v362
    %v364 = vmul.f32 %v359, %v363
    %v365 = vpack.c.bf16 %v364, %v364
    %367 = vrot.lane.b32.xlu0 %v331, 64
    %v368 = vpop.permute.xlu0 %367
    %vm370 = vcmask 130048
    %v372 = vsel %vm370, %v365, 0
    %374 = vmatpush.bf16.msra.mxu0 0
    %375 = vmatpush.bf16.msra.mxu0 0
    %376 = vmatpush.bf16.msra.mxu0 0
    %377 = vmatpush.bf16.msra.mxu0 0
    %378 = vmatpush.bf16.msra.mxu0 0
    %379 = vmatpush.bf16.msra.mxu0 0
    %380 = vmatpush.bf16.msra.mxu0 0
    %381 = vmatpush.bf16.msra.mxu0 %v368
    %382 = vmatmul.bf16.gmra.mxu0 %v372
    %v383 = vpop.f32.mrf.mxu0
    %v384 = vadd.f32 0.0, %v383
    %v385 = vpop.f32.mrf.mxu0
    %386 = vdwg.mxu0
    %v387 = vadd.f32 %v194, %v384
    %389 = vrot.lane.b32.xlu0 %v332, 96
    %v390 = vpop.permute.xlu0 %389
    %391 = vrot.lane.b32.xlu0 %v331, 96
    %v392 = vpop.permute.xlu0 %391
    %v394 = vsel %vm215, %v390, 0
    %v397 = vsel %vm215, %v392, 0
    %399 = vmatpush.bf16.xpose.msra.mxu0 0
    %400 = vmatpush.bf16.xpose.msra.mxu0 0
    %401 = vmatpush.bf16.xpose.msra.mxu0 0
    %402 = vmatpush.bf16.xpose.msra.mxu0 0
    %403 = vmatpush.bf16.xpose.msra.mxu0 0
    %404 = vmatpush.bf16.xpose.msra.mxu0 0
    %405 = vmatpush.bf16.xpose.msra.mxu0 0
    %406 = vmatpush.bf16.xpose.msra.mxu0 %v397
    %407 = vmatmul.bf16.gmra.mxu0 %v394
    %v408 = vpop.f32.mrf.mxu0
    %v409 = vadd.f32 %v333, %v408
    %v410 = vpop.f32.mrf.mxu0
    %411 = vdwg.mxu0
    %v412 = vsel %vm353, %v409, -inf
    %413 = vmax.xlane.f32.xlu0 %v412
    %v414 = vpop.xlane.xlu0 %413
    %v415 = vsub.f32 %v409, %v414
    %v416 = vmul.f32 %v415, 1.442695
    %v417 = vpow.pop %v416
    %v418 = vsel %vm353, %v417, 0.0
    %419 = vadd.xlane.f32.xlu0 %v418
    %v420 = vpop.xlane.xlu0 %419
    %v421 = vrcp.pop %v420
    %v422 = vmul.f32 %v417, %v421
    %v423 = vpack.c.bf16 %v422, %v422
    %424 = vrot.lane.b32.xlu0 %v331, 32
    %v425 = vpop.permute.xlu0 %424
    %v428 = vsel %vm370, %v423, 0
    %430 = vmatpush.bf16.msra.mxu0 0
    %431 = vmatpush.bf16.msra.mxu0 0
    %432 = vmatpush.bf16.msra.mxu0 0
    %433 = vmatpush.bf16.msra.mxu0 0
    %434 = vmatpush.bf16.msra.mxu0 0
    %435 = vmatpush.bf16.msra.mxu0 0
    %436 = vmatpush.bf16.msra.mxu0 0
    %437 = vmatpush.bf16.msra.mxu0 %v425
    %438 = vmatmul.bf16.gmra.mxu0 %v428
    %v439 = vpop.f32.mrf.mxu0
    %v440 = vadd.f32 0.0, %v439
    %v441 = vpop.f32.mrf.mxu0
    %442 = vdwg.mxu0
    %444 = vrot.lane.b32.xlu0 %v440, 32
    %v445 = vpop.permute.xlu0 %444
    %v447 = vadd.f32 %v194, %v445
    %v448 = vsel %vm215, %v387, %v447
    %v449 = vpack.c.bf16 %v329, %v327
    %v450 = vperm.slane %v140, 1
    %v452 = vsel %vm215, %v449, 0
    %454 = vmatpush.bf16.xpose.msra.mxu0 0
    %455 = vmatpush.bf16.xpose.msra.mxu0 0
    %456 = vmatpush.bf16.xpose.msra.mxu0 0
    %457 = vmatpush.bf16.xpose.msra.mxu0 0
    %458 = vmatpush.bf16.xpose.msra.mxu0 0
    %459 = vmatpush.bf16.xpose.msra.mxu0 0
    %460 = vmatpush.bf16.xpose.msra.mxu0 0
    %461 = vmatpush.bf16.xpose.msra.mxu0 %v452
    %462 = vmatmul.bf16.gmra.mxu0 %v335
    %v463 = vpop.f32.mrf.mxu0
    %v464 = vadd.f32 %v450, %v463
    %v465 = vpop.f32.mrf.mxu0
    %466 = vdwg.mxu0
    %v467 = vsel %vm353, %v464, -inf
    %468 = vmax.xlane.f32.xlu0 %v467
    %v469 = vpop.xlane.xlu0 %468
    %v470 = vsub.f32 %v464, %v469
    %v471 = vmul.f32 %v470, 1.442695
    %v472 = vpow.pop %v471
    %v473 = vsel %vm353, %v472, 0.0
    %474 = vadd.xlane.f32.xlu0 %v473
    %v475 = vpop.xlane.xlu0 %474
    %v476 = vrcp.pop %v475
    %v477 = vmul.f32 %v472, %v476
    %v478 = vpack.c.bf16 %v477, %v477
    %480 = vrot.lane.b32.xlu0 %v449, 64
    %v481 = vpop.permute.xlu0 %480
    %v484 = vsel %vm370, %v478, 0
    %486 = vmatpush.bf16.msra.mxu0 0
    %487 = vmatpush.bf16.msra.mxu0 0
    %488 = vmatpush.bf16.msra.mxu0 0
    %489 = vmatpush.bf16.msra.mxu0 0
    %490 = vmatpush.bf16.msra.mxu0 0
    %491 = vmatpush.bf16.msra.mxu0 0
    %492 = vmatpush.bf16.msra.mxu0 0
    %493 = vmatpush.bf16.msra.mxu0 %v481
    %494 = vmatmul.bf16.gmra.mxu0 %v484
    %v495 = vpop.f32.mrf.mxu0
    %v496 = vadd.f32 0.0, %v495
    %v497 = vpop.f32.mrf.mxu0
    %498 = vdwg.mxu0
    %v499 = vadd.f32 %v194, %v496
    %500 = vrot.lane.b32.xlu0 %v449, 96
    %v501 = vpop.permute.xlu0 %500
    %v503 = vsel %vm215, %v501, 0
    %505 = vmatpush.bf16.xpose.msra.mxu0 0
    %506 = vmatpush.bf16.xpose.msra.mxu0 0
    %507 = vmatpush.bf16.xpose.msra.mxu0 0
    %508 = vmatpush.bf16.xpose.msra.mxu0 0
    %509 = vmatpush.bf16.xpose.msra.mxu0 0
    %510 = vmatpush.bf16.xpose.msra.mxu0 0
    %511 = vmatpush.bf16.xpose.msra.mxu0 0
    %512 = vmatpush.bf16.xpose.msra.mxu0 %v503
    %513 = vmatmul.bf16.gmra.mxu0 %v394
    %v514 = vpop.f32.mrf.mxu0
    %v515 = vadd.f32 %v450, %v514
    %v516 = vpop.f32.mrf.mxu0
    %517 = vdwg.mxu0
    %v518 = vsel %vm353, %v515, -inf
    %519 = vmax.xlane.f32.xlu0 %v518
    %v520 = vpop.xlane.xlu0 %519
    %v521 = vsub.f32 %v515, %v520
    %v522 = vmul.f32 %v521, 1.442695
    %v523 = vpow.pop %v522
    %v524 = vsel %vm353, %v523, 0.0
    %525 = vadd.xlane.f32.xlu0 %v524
    %v526 = vpop.xlane.xlu0 %525
    %v527 = vrcp.pop %v526
    %v528 = vmul.f32 %v523, %v527
    %v529 = vpack.c.bf16 %v528, %v528
    %530 = vrot.lane.b32.xlu0 %v449, 32
    %v531 = vpop.permute.xlu0 %530
    %v534 = vsel %vm370, %v529, 0
    %536 = vmatpush.bf16.msra.mxu0 0
    %537 = vmatpush.bf16.msra.mxu0 0
    %538 = vmatpush.bf16.msra.mxu0 0
    %539 = vmatpush.bf16.msra.mxu0 0
    %540 = vmatpush.bf16.msra.mxu0 0
    %541 = vmatpush.bf16.msra.mxu0 0
    %542 = vmatpush.bf16.msra.mxu0 0
    %543 = vmatpush.bf16.msra.mxu0 %v531
    %544 = vmatmul.bf16.gmra.mxu0 %v534
    %v545 = vpop.f32.mrf.mxu0
    %v546 = vadd.f32 0.0, %v545
    %v547 = vpop.f32.mrf.mxu0
    %548 = vdwg.mxu0
    %550 = vrot.lane.b32.xlu0 %v546, 32
    %v551 = vpop.permute.xlu0 %550
    %v553 = vadd.f32 %v194, %v551
    %v554 = vsel %vm215, %v499, %v553
    %v556 = vrot.slane %v554, 4
    %vm558 = vcmask 1043456
    %v559 = vsel %vm558, %v448, %v556
    %v560 = vpack.c.bf16 %v559, %v559
    %v561 = vld [vmem:[%s19] sm:$0xf]
    %v562 = vld [vmem:[%s19 + $0x4] sm:$0xf]
    %v563 = vld [vmem:[%s19 + $0x8] sm:$0xf]
    %v564 = vld [vmem:[%s19 + $0xc] sm:$0xf]
    %v565 = vld [vmem:[%s19 + $0x10] sm:$0xf]
    %v566 = vld [vmem:[%s19 + $0x14] sm:$0xf]
    %v567 = vld [vmem:[%s19 + $0x18] sm:$0xf]
    %v568 = vld [vmem:[%s19 + $0x1c] sm:$0xf]
    %v569 = vld [vmem:[%s21] sm:$0x1]
    %v571 = vperm.slane %v569, 0
    %v581 = vunpack.c.l.b16 %v561
    %v582 = vunpack.c.l.b16 %v562
    %v583 = vunpack.c.l.b16 %v563
    %v584 = vunpack.c.l.b16 %v564
    %v585 = vunpack.c.l.b16 %v565
    %v586 = vunpack.c.l.b16 %v566
    %v587 = vunpack.c.l.b16 %v567
    %v588 = vunpack.c.l.b16 %v568
    %v589 = vpack.c.b16 %v582, %v581
    %v590 = vpack.c.b16 %v584, %v583
    %v591 = vpack.c.b16 %v586, %v585
    %v592 = vpack.c.b16 %v588, %v587
    %v598 = vsel %vm180, %v560, 0
    %600 = vmatpush.bf16.msra.mxu0 0
    %601 = vmatpush.bf16.msra.mxu0 0
    %602 = vmatpush.bf16.msra.mxu0 0
    %603 = vmatpush.bf16.msra.mxu0 0
    %604 = vmatpush.bf16.msra.mxu0 %v592
    %605 = vmatpush.bf16.msra.mxu0 %v591
    %606 = vmatpush.bf16.msra.mxu0 %v590
    %607 = vmatpush.bf16.msra.mxu0 %v589
    %608 = vmatmul.bf16.gmra.mxu0 %v598
    %v609 = vpop.f32.mrf.mxu0
    %v610 = vadd.f32 %v571, %v609
    %v611 = vpop.f32.mrf.mxu0
    %612 = vdwg.mxu0
    %v613 = vmax.f32 %v610, 0.0
    %v614 = vadd.f32 %v559, %v613
    %v615 = vpack.c.bf16 %v614, %v614
    %v616 = vld [vmem:[%s23] sm:$0xf]
    %v617 = vld [vmem:[%s23 + $0x4] sm:$0xf]
    %v618 = vld [vmem:[%s23 + $0x8] sm:$0xf]
    %v619 = vld [vmem:[%s23 + $0xc] sm:$0xf]
    %v620 = vld [vmem:[%s23 + $0x10] sm:$0xf]
    %v621 = vld [vmem:[%s23 + $0x14] sm:$0xf]
    %v622 = vld [vmem:[%s23 + $0x18] sm:$0xf]
    %v623 = vld [vmem:[%s23 + $0x1c] sm:$0xf]
    %v624 = vld [vmem:[%s25] sm:$0x1]
    %v626 = vperm.slane %v624, 0
    %v636 = vunpack.c.l.b16 %v616
    %v637 = vunpack.c.l.b16 %v617
    %v638 = vunpack.c.l.b16 %v618
    %v639 = vunpack.c.l.b16 %v619
    %v640 = vunpack.c.l.b16 %v620
    %v641 = vunpack.c.l.b16 %v621
    %v642 = vunpack.c.l.b16 %v622
    %v643 = vunpack.c.l.b16 %v623
    %v644 = vpack.c.b16 %v637, %v636
    %v645 = vpack.c.b16 %v639, %v638
    %v646 = vpack.c.b16 %v641, %v640
    %v647 = vpack.c.b16 %v643, %v642
    %v653 = vsel %vm180, %v615, 0
    %655 = vmatpush.bf16.msra.mxu0 0
    %656 = vmatpush.bf16.msra.mxu0 0
    %657 = vmatpush.bf16.msra.mxu0 0
    %658 = vmatpush.bf16.msra.mxu0 0
    %659 = vmatpush.bf16.msra.mxu0 %v647
    %660 = vmatpush.bf16.msra.mxu0 %v646
    %661 = vmatpush.bf16.msra.mxu0 %v645
    %662 = vmatpush.bf16.msra.mxu0 %v644
    %663 = vmatmul.bf16.gmra.mxu0 %v653
    %v664 = vpop.f32.mrf.mxu0
    %v665 = vadd.f32 %v626, %v664
    %v666 = vpop.f32.mrf.mxu0
    %667 = vdwg.mxu0
    %v668 = vld [vmem:[%s27] sm:$0xf]
    %v669 = vld [vmem:[%s27 + $0x4] sm:$0xf]
    %v670 = vld [vmem:[%s27 + $0x8] sm:$0xf]
    %v671 = vld [vmem:[%s27 + $0xc] sm:$0xf]
    %v672 = vld [vmem:[%s27 + $0x10] sm:$0xf]
    %v673 = vld [vmem:[%s27 + $0x14] sm:$0xf]
    %v674 = vld [vmem:[%s27 + $0x18] sm:$0xf]
    %v675 = vld [vmem:[%s27 + $0x1c] sm:$0xf]
    %v676 = vld [vmem:[%s29] sm:$0x1]
    %v678 = vperm.slane %v676, 0
    %v688 = vunpack.c.l.b16 %v668
    %v689 = vunpack.c.l.b16 %v669
    %v690 = vunpack.c.l.b16 %v670
    %v691 = vunpack.c.l.b16 %v671
    %v692 = vunpack.c.l.b16 %v672
    %v693 = vunpack.c.l.b16 %v673
    %v694 = vunpack.c.l.b16 %v674
    %v695 = vunpack.c.l.b16 %v675
    %v696 = vpack.c.b16 %v689, %v688
    %v697 = vpack.c.b16 %v691, %v690
    %v698 = vpack.c.b16 %v693, %v692
    %v699 = vpack.c.b16 %v695, %v694
    %704 = vmatpush.bf16.msra.mxu0 0
    %705 = vmatpush.bf16.msra.mxu0 0
    %706 = vmatpush.bf16.msra.mxu0 0
    %707 = vmatpush.bf16.msra.mxu0 0
    %708 = vmatpush.bf16.msra.mxu0 %v699
    %709 = vmatpush.bf16.msra.mxu0 %v698
    %710 = vmatpush.bf16.msra.mxu0 %v697
    %711 = vmatpush.bf16.msra.mxu0 %v696
    %712 = vmatmul.bf16.gmra.mxu0 %v653
    %v713 = vpop.f32.mrf.mxu0
    %v714 = vadd.f32 %v678, %v713
    %v715 = vpop.f32.mrf.mxu0
    %716 = vdwg.mxu0
    %v717 = vpack.c.bf16 %v714, %v714
    %v718 = vpack.c.bf16 %v665, %v665
    %v720 = vsel %vm370, %v718, 0
    %v723 = vsel %vm370, %v717, 0
    %725 = vmatpush.bf16.xpose.msra.mxu0 0
    %726 = vmatpush.bf16.xpose.msra.mxu0 0
    %727 = vmatpush.bf16.xpose.msra.mxu0 0
    %728 = vmatpush.bf16.xpose.msra.mxu0 0
    %729 = vmatpush.bf16.xpose.msra.mxu0 0
    %730 = vmatpush.bf16.xpose.msra.mxu0 0
    %731 = vmatpush.bf16.xpose.msra.mxu0 0
    %732 = vmatpush.bf16.xpose.msra.mxu0 %v723
    %733 = vmatmul.bf16.gmra.mxu0 %v720
    %v734 = vpop.f32.mrf.mxu0
    %v735 = vadd.f32 %v141, %v734
    %v736 = vpop.f32.mrf.mxu0
    %737 = vdwg.mxu0
    %vm738 = vcmask 64512
    %v739 = vsel %vm738, %v735, -inf
    %740 = vmax.xlane.f32.xlu0 %v739
    %v741 = vpop.xlane.xlu0 %740
    %v742 = vsub.f32 %v735, %v741
    %v743 = vmul.f32 %v742, 1.442695
    %v744 = vpow.pop %v743
    %v745 = vsel %vm738, %v744, 0.0
    %746 = vadd.xlane.f32.xlu0 %v745
    %v747 = vpop.xlane.xlu0 %746
    %v748 = vrcp.pop %v747
    %v749 = vmul.f32 %v744, %v748
    %v750 = vpack.c.bf16 %v749, %v749
    %752 = vrot.lane.b32.xlu0 %v717, 96
    %v753 = vpop.permute.xlu0 %752
    %v755 = vsel %vm738, %v750, 0
    %v758 = vsel %vm558, %v753, 0
    %760 = vmatpush.bf16.msra.mxu0 0
    %761 = vmatpush.bf16.msra.mxu0 0
    %762 = vmatpush.bf16.msra.mxu0 0
    %763 = vmatpush.bf16.msra.mxu0 0
    %764 = vmatpush.bf16.msra.mxu0 0
    %765 = vmatpush.bf16.msra.mxu0 0
    %766 = vmatpush.bf16.msra.mxu0 0
    %767 = vmatpush.bf16.msra.mxu0 %v758
    %768 = vmatmul.bf16.gmra.mxu0 %v755
    %v769 = vpop.f32.mrf.mxu0
    %v770 = vadd.f32 0.0, %v769
    %v771 = vpop.f32.mrf.mxu0
    %772 = vdwg.mxu0
    %v773 = vadd.f32 %v665, %v770
    %775 = vrot.lane.b32.xlu0 %v718, 112
    %v776 = vpop.permute.xlu0 %775
    %777 = vrot.lane.b32.xlu0 %v717, 112
    %v778 = vpop.permute.xlu0 %777
    %v780 = vsel %vm370, %v776, 0
    %v783 = vsel %vm370, %v778, 0
    %785 = vmatpush.bf16.xpose.msra.mxu0 0
    %786 = vmatpush.bf16.xpose.msra.mxu0 0
    %787 = vmatpush.bf16.xpose.msra.mxu0 0
    %788 = vmatpush.bf16.xpose.msra.mxu0 0
    %789 = vmatpush.bf16.xpose.msra.mxu0 0
    %790 = vmatpush.bf16.xpose.msra.mxu0 0
    %791 = vmatpush.bf16.xpose.msra.mxu0 0
    %792 = vmatpush.bf16.xpose.msra.mxu0 %v783
    %793 = vmatmul.bf16.gmra.mxu0 %v780
    %v794 = vpop.f32.mrf.mxu0
    %v795 = vadd.f32 %v141, %v794
    %v796 = vpop.f32.mrf.mxu0
    %797 = vdwg.mxu0
    %v798 = vsel %vm738, %v795, -inf
    %799 = vmax.xlane.f32.xlu0 %v798
    %v800 = vpop.xlane.xlu0 %799
    %v801 = vsub.f32 %v795, %v800
    %v802 = vmul.f32 %v801, 1.442695
    %v803 = vpow.pop %v802
    %v804 = vsel %vm738, %v803, 0.0
    %805 = vadd.xlane.f32.xlu0 %v804
    %v806 = vpop.xlane.xlu0 %805
    %v807 = vrcp.pop %v806
    %v808 = vmul.f32 %v803, %v807
    %v809 = vpack.c.bf16 %v808, %v808
    %810 = vrot.lane.b32.xlu0 %v717, 80
    %v811 = vpop.permute.xlu0 %810
    %v813 = vsel %vm738, %v809, 0
    %v816 = vsel %vm558, %v811, 0
    %818 = vmatpush.bf16.msra.mxu0 0
    %819 = vmatpush.bf16.msra.mxu0 0
    %820 = vmatpush.bf16.msra.mxu0 0
    %821 = vmatpush.bf16.msra.mxu0 0
    %822 = vmatpush.bf16.msra.mxu0 0
    %823 = vmatpush.bf16.msra.mxu0 0
    %824 = vmatpush.bf16.msra.mxu0 0
    %825 = vmatpush.bf16.msra.mxu0 %v816
    %826 = vmatmul.bf16.gmra.mxu0 %v813
    %v827 = vpop.f32.mrf.mxu0
    %v828 = vadd.f32 0.0, %v827
    %v829 = vpop.f32.mrf.mxu0
    %830 = vdwg.mxu0
    %832 = vrot.lane.b32.xlu0 %v828, 16
    %v833 = vpop.permute.xlu0 %832
    %v835 = vadd.f32 %v665, %v833
    %v836 = vsel %vm370, %v773, %v835
    %v837 = vpack.c.bf16 %v836, %v836
    %v838 = vld [vmem:[%s31] sm:$0xf]
    %v839 = vld [vmem:[%s31 + $0x4] sm:$0xf]
    %v840 = vld [vmem:[%s31 + $0x8] sm:$0xf]
    %v841 = vld [vmem:[%s31 + $0xc] sm:$0xf]
    %v842 = vld [vmem:[%s33] sm:$0x1]
    %v844 = vperm.slane %v842, 0
    %v850 = vunpack.c.l.b16 %v838
    %v851 = vunpack.c.l.b16 %v839
    %v852 = vunpack.c.l.b16 %v840
    %v853 = vunpack.c.l.b16 %v841
    %v854 = vpack.c.b16 %v851, %v850
    %v855 = vpack.c.b16 %v853, %v852
    %v859 = vsel %vm215, %v837, 0
    %861 = vmatpush.bf16.msra.mxu0 0
    %862 = vmatpush.bf16.msra.mxu0 0
    %863 = vmatpush.bf16.msra.mxu0 0
    %864 = vmatpush.bf16.msra.mxu0 0
    %865 = vmatpush.bf16.msra.mxu0 0
    %866 = vmatpush.bf16.msra.mxu0 0
    %867 = vmatpush.bf16.msra.mxu0 %v855
    %868 = vmatpush.bf16.msra.mxu0 %v854
    %869 = vmatmul.bf16.gmra.mxu0 %v859
    %v870 = vpop.f32.mrf.mxu0
    %v871 = vadd.f32 %v844, %v870
    %v872 = vpop.f32.mrf.mxu0
    %873 = vdwg.mxu0
    %v874 = vmax.f32 %v871, 0.0
    %v875 = vadd.f32 %v836, %v874
    %v876 = vpack.c.bf16 %v875, %v875
    %v877 = vld [vmem:[%s41] sm:$0xf]
    %v878 = vld [vmem:[%s41 + $0x4] sm:$0xf]
    %v879 = vld [vmem:[%s41 + $0x8] sm:$0xf]
    %v880 = vld [vmem:[%s41 + $0xc] sm:$0xf]
    %v881 = vld [vmem:[%s43] sm:$0x1]
    %v883 = vperm.slane %v881, 0
    %v889 = vunpack.c.l.b16 %v877
    %v890 = vunpack.c.l.b16 %v878
    %v891 = vunpack.c.l.b16 %v879
    %v892 = vunpack.c.l.b16 %v880
    %v893 = vpack.c.b16 %v890, %v889
    %v894 = vpack.c.b16 %v892, %v891
    %v898 = vsel %vm215, %v876, 0
    %900 = vmatpush.bf16.msra.mxu0 0
    %901 = vmatpush.bf16.msra.mxu0 0
    %902 = vmatpush.bf16.msra.mxu0 0
    %903 = vmatpush.bf16.msra.mxu0 0
    %904 = vmatpush.bf16.msra.mxu0 0
    %905 = vmatpush.bf16.msra.mxu0 0
    %906 = vmatpush.bf16.msra.mxu0 %v894
    %907 = vmatpush.bf16.msra.mxu0 %v893
    %908 = vmatmul.bf16.gmra.mxu0 %v898
    %v909 = vpop.f32.mrf.mxu0
    %v910 = vadd.f32 %v883, %v909
    %v911 = vpop.f32.mrf.mxu0
    %912 = vdwg.mxu0
    %v913 = vperm.slane %v229, 0
    %v914 = vpack.c.bf16 %v910, %v910
    %v915 = vpack.c.bf16 %v913, %v913
    %v917 = vsel %vm370, %v915, 0
    %v920 = vsel %vm370, %v914, 0
    %922 = vmatpush.bf16.xpose.msra.mxu0 0
    %923 = vmatpush.bf16.xpose.msra.mxu0 0
    %924 = vmatpush.bf16.xpose.msra.mxu0 0
    %925 = vmatpush.bf16.xpose.msra.mxu0 0
    %926 = vmatpush.bf16.xpose.msra.mxu0 0
    %927 = vmatpush.bf16.xpose.msra.mxu0 0
    %928 = vmatpush.bf16.xpose.msra.mxu0 0
    %929 = vmatpush.bf16.xpose.msra.mxu0 %v920
    %930 = vmatmul.bf16.gmra.mxu0 %v917
    %v931 = vpop.f32.mrf.mxu0
    %v932 = vadd.f32 %v142, %v931
    %v933 = vpop.f32.mrf.mxu0
    %934 = vdwg.mxu0
    %vm935 = vcmask 58368
    %v936 = vsel %vm935, %v932, -inf
    %937 = vmax.xlane.f32.xlu0 %v936
    %v938 = vpop.xlane.xlu0 %937
    %v939 = vsub.f32 %v932, %v938
    %v940 = vmul.f32 %v939, 1.442695
    %v941 = vpow.pop %v940
    %v942 = vsel %vm935, %v941, 0.0
    %943 = vadd.xlane.f32.xlu0 %v942
    %v944 = vpop.xlane.xlu0 %943
    %v945 = vrcp.pop %v944
    %v946 = vmul.f32 %v941, %v945
    %v947 = vpack.c.bf16 %v946, %v946
    %949 = vrot.lane.b32.xlu0 %v914, 96
    %v950 = vpop.permute.xlu0 %949
    %v952 = vsel %vm738, %v947, 0
    %v955 = vsel %vm558, %v950, 0
    %957 = vmatpush.bf16.msra.mxu0 0
    %958 = vmatpush.bf16.msra.mxu0 0
    %959 = vmatpush.bf16.msra.mxu0 0
    %960 = vmatpush.bf16.msra.mxu0 0
    %961 = vmatpush.bf16.msra.mxu0 0
    %962 = vmatpush.bf16.msra.mxu0 0
    %963 = vmatpush.bf16.msra.mxu0 0
    %964 = vmatpush.bf16.msra.mxu0 %v955
    %965 = vmatmul.bf16.gmra.mxu0 %v952
    %v966 = vpop.f32.mrf.mxu0
    %v967 = vadd.f32 0.0, %v966
    %v968 = vpop.f32.mrf.mxu0
    %969 = vdwg.mxu0
    %v970 = vadd.f32 %v913, %v967
    %972 = vrot.lane.b32.xlu0 %v915, 112
    %v973 = vpop.permute.xlu0 %972
    %974 = vrot.lane.b32.xlu0 %v914, 112
    %v975 = vpop.permute.xlu0 %974
    %v977 = vsel %vm370, %v973, 0
    %v980 = vsel %vm370, %v975, 0
    %982 = vmatpush.bf16.xpose.msra.mxu0 0
    %983 = vmatpush.bf16.xpose.msra.mxu0 0
    %984 = vmatpush.bf16.xpose.msra.mxu0 0
    %985 = vmatpush.bf16.xpose.msra.mxu0 0
    %986 = vmatpush.bf16.xpose.msra.mxu0 0
    %987 = vmatpush.bf16.xpose.msra.mxu0 0
    %988 = vmatpush.bf16.xpose.msra.mxu0 0
    %989 = vmatpush.bf16.xpose.msra.mxu0 %v980
    %990 = vmatmul.bf16.gmra.mxu0 %v977
    %v991 = vpop.f32.mrf.mxu0
    %v992 = vadd.f32 %v142, %v991
    %v993 = vpop.f32.mrf.mxu0
    %994 = vdwg.mxu0
    %v995 = vsel %vm935, %v992, -inf
    %996 = vmax.xlane.f32.xlu0 %v995
    %v997 = vpop.xlane.xlu0 %996
    %v998 = vsub.f32 %v992, %v997
    %v999 = vmul.f32 %v998, 1.442695
    %v1000 = vpow.pop %v999
    %v1001 = vsel %vm935, %v1000, 0.0
    %1002 = vadd.xlane.f32.xlu0 %v1001
    %v1003 = vpop.xlane.xlu0 %1002
    %v1004 = vrcp.pop %v1003
    %v1005 = vmul.f32 %v1000, %v1004
    %v1006 = vpack.c.bf16 %v1005, %v1005
    %1007 = vrot.lane.b32.xlu0 %v914, 80
    %v1008 = vpop.permute.xlu0 %1007
    %v1010 = vsel %vm738, %v1006, 0
    %v1013 = vsel %vm558, %v1008, 0
    %1015 = vmatpush.bf16.msra.mxu0 0
    %1016 = vmatpush.bf16.msra.mxu0 0
    %1017 = vmatpush.bf16.msra.mxu0 0
    %1018 = vmatpush.bf16.msra.mxu0 0
    %1019 = vmatpush.bf16.msra.mxu0 0
    %1020 = vmatpush.bf16.msra.mxu0 0
    %1021 = vmatpush.bf16.msra.mxu0 0
    %1022 = vmatpush.bf16.msra.mxu0 %v1013
    %1023 = vmatmul.bf16.gmra.mxu0 %v1010
    %v1024 = vpop.f32.mrf.mxu0
    %v1025 = vadd.f32 0.0, %v1024
    %v1026 = vpop.f32.mrf.mxu0
    %1027 = vdwg.mxu0
    %1029 = vrot.lane.b32.xlu0 %v1025, 16
    %v1030 = vpop.permute.xlu0 %1029
    %v1032 = vadd.f32 %v913, %v1030
    %v1033 = vsel %vm370, %v970, %v1032
    %v1034 = vpack.c.bf16 %v1033, %v1033
    %v1035 = vld [vmem:[%s45] sm:$0xf]
    %v1036 = vld [vmem:[%s45 + $0x4] sm:$0xf]
    %v1037 = vld [vmem:[%s45 + $0x8] sm:$0xf]
    %v1038 = vld [vmem:[%s45 + $0xc] sm:$0xf]
    %v1039 = vld [vmem:[%s47] sm:$0x1]
    %v1041 = vperm.slane %v1039, 0
    %v1047 = vunpack.c.l.b16 %v1035
    %v1048 = vunpack.c.l.b16 %v1036
    %v1049 = vunpack.c.l.b16 %v1037
    %v1050 = vunpack.c.l.b16 %v1038
    %v1051 = vpack.c.b16 %v1048, %v1047
    %v1052 = vpack.c.b16 %v1050, %v1049
    %v1056 = vsel %vm215, %v1034, 0
    %1058 = vmatpush.bf16.msra.mxu0 0
    %1059 = vmatpush.bf16.msra.mxu0 0
    %1060 = vmatpush.bf16.msra.mxu0 0
    %1061 = vmatpush.bf16.msra.mxu0 0
    %1062 = vmatpush.bf16.msra.mxu0 0
    %1063 = vmatpush.bf16.msra.mxu0 0
    %1064 = vmatpush.bf16.msra.mxu0 %v1052
    %1065 = vmatpush.bf16.msra.mxu0 %v1051
    %1066 = vmatmul.bf16.gmra.mxu0 %v1056
    %v1067 = vpop.f32.mrf.mxu0
    %v1068 = vadd.f32 %v1041, %v1067
    %v1069 = vpop.f32.mrf.mxu0
    %1070 = vdwg.mxu0
    %v1071 = vmax.f32 %v1068, 0.0
    %v1072 = vadd.f32 %v1033, %v1071
    %v1073 = vpack.c.bf16 %v1072, %v1072
    %v1074 = vld [vmem:[%s49] sm:$0xf]
    %v1075 = vld [vmem:[%s49 + $0x4] sm:$0xf]
    %v1076 = vld [vmem:[%s49 + $0x8] sm:$0xf]
    %v1077 = vld [vmem:[%s49 + $0xc] sm:$0xf]
    %v1078 = vld [vmem:[%s51] sm:$0x1]
    %v1080 = vperm.slane %v1078, 0
    %v1086 = vunpack.c.l.b16 %v1074
    %v1087 = vunpack.c.l.b16 %v1075
    %v1088 = vunpack.c.l.b16 %v1076
    %v1089 = vunpack.c.l.b16 %v1077
    %v1090 = vpack.c.b16 %v1087, %v1086
    %v1091 = vpack.c.b16 %v1089, %v1088
    %v1095 = vsel %vm215, %v1073, 0
    %1097 = vmatpush.bf16.msra.mxu0 0
    %1098 = vmatpush.bf16.msra.mxu0 0
    %1099 = vmatpush.bf16.msra.mxu0 0
    %1100 = vmatpush.bf16.msra.mxu0 0
    %1101 = vmatpush.bf16.msra.mxu0 0
    %1102 = vmatpush.bf16.msra.mxu0 0
    %1103 = vmatpush.bf16.msra.mxu0 %v1091
    %1104 = vmatpush.bf16.msra.mxu0 %v1090
    %1105 = vmatmul.bf16.gmra.mxu0 %v1095
    %v1106 = vpop.f32.mrf.mxu0
    %v1107 = vadd.f32 %v1080, %v1106
    %v1108 = vpop.f32.mrf.mxu0
    %1109 = vdwg.mxu0
    %v1110 = vpack.c.bf16 %v1107, %v1107
    %v1111 = vld [vmem:[%s53] sm:$0xf]
    %v1112 = vld [vmem:[%s53 + $0x4] sm:$0xf]
    %v1113 = vld [vmem:[%s53 + $0x8] sm:$0xf]
    %v1114 = vld [vmem:[%s53 + $0xc] sm:$0xf]
    %v1115 = vld [vmem:[%s55] sm:$0x1]
    %v1117 = vperm.slane %v1115, 0
    %v1123 = vunpack.c.l.b16 %v1111
    %v1124 = vunpack.c.l.b16 %v1112
    %v1125 = vunpack.c.l.b16 %v1113
    %v1126 = vunpack.c.l.b16 %v1114
    %v1127 = vpack.c.b16 %v1124, %v1123
    %v1128 = vpack.c.b16 %v1126, %v1125
    %v1132 = vsel %vm215, %v1110, 0
    %1134 = vmatpush.bf16.msra.mxu0 0
    %1135 = vmatpush.bf16.msra.mxu0 0
    %1136 = vmatpush.bf16.msra.mxu0 0
    %1137 = vmatpush.bf16.msra.mxu0 0
    %1138 = vmatpush.bf16.msra.mxu0 0
    %1139 = vmatpush.bf16.msra.mxu0 0
    %1140 = vmatpush.bf16.msra.mxu0 %v1128
    %1141 = vmatpush.bf16.msra.mxu0 %v1127
    %1142 = vmatmul.bf16.gmra.mxu0 %v1132
    %v1143 = vpop.f32.mrf.mxu0
    %v1144 = vadd.f32 %v1117, %v1143
    %v1145 = vpop.f32.mrf.mxu0
    %1146 = vdwg.mxu0
    %v1147 = vmax.f32 %v1144, 0.0
    %v1148 = vpack.c.bf16 %v1147, %v1147
    %v1149 = vld [vmem:[%s57] sm:$0xf]
    %v1150 = vld [vmem:[%s57 + $0x4] sm:$0xf]
    %v1151 = vld [vmem:[%s57 + $0x8] sm:$0xf]
    %v1152 = vld [vmem:[%s57 + $0xc] sm:$0xf]
    %v1153 = vld [vmem:[%s59] sm:$0x1]
    %v1155 = vperm.slane %v1153, 0
    %v1161 = vunpack.c.l.b16 %v1149
    %v1162 = vunpack.c.l.b16 %v1150
    %v1163 = vunpack.c.l.b16 %v1151
    %v1164 = vunpack.c.l.b16 %v1152
    %v1165 = vpack.c.b16 %v1162, %v1161
    %v1166 = vpack.c.b16 %v1164, %v1163
    %v1170 = vsel %vm215, %v1148, 0
    %1172 = vmatpush.bf16.msra.mxu0 0
    %1173 = vmatpush.bf16.msra.mxu0 0
    %1174 = vmatpush.bf16.msra.mxu0 0
    %1175 = vmatpush.bf16.msra.mxu0 0
    %1176 = vmatpush.bf16.msra.mxu0 0
    %1177 = vmatpush.bf16.msra.mxu0 0
    %1178 = vmatpush.bf16.msra.mxu0 %v1166
    %1179 = vmatpush.bf16.msra.mxu0 %v1165
    %1180 = vmatmul.bf16.gmra.mxu0 %v1170
    %v1181 = vpop.f32.mrf.mxu0
    %v1182 = vadd.f32 %v1155, %v1181
    %v1183 = vpop.f32.mrf.mxu0
    %1184 = vdwg.mxu0
    %v1185 = vmax.f32 %v1182, 0.0
    %v1186 = vpack.c.bf16 %v1185, %v1185
    %v1187 = vld [vmem:[%s61] sm:$0xf]
    %v1188 = vld [vmem:[%s61 + $0x4] sm:$0xf]
    %v1189 = vld [vmem:[%s63] sm:$0x1]
    %v1191 = vperm.slane %v1189, 0
    %v1195 = vunpack.c.l.b16 %v1187
    %v1196 = vunpack.c.l.b16 %v1188
    %v1197 = vpack.c.b16 %v1196, %v1195
    %v1200 = vsel %vm370, %v1186, 0
    %1202 = vmatpush.bf16.msra.mxu0 0
    %1203 = vmatpush.bf16.msra.mxu0 0
    %1204 = vmatpush.bf16.msra.mxu0 0
    %1205 = vmatpush.bf16.msra.mxu0 0
    %1206 = vmatpush.bf16.msra.mxu0 0
    %1207 = vmatpush.bf16.msra.mxu0 0
    %1208 = vmatpush.bf16.msra.mxu0 0
    %1209 = vmatpush.bf16.msra.mxu0 %v1197
    %1210 = vmatmul.bf16.gmra.mxu0 %v1200
    %v1211 = vpop.f32.mrf.mxu0
    %v1212 = vadd.f32 %v1191, %v1211
    %v1213 = vpop.f32.mrf.mxu0
    %1214 = vdwg.mxu0
    %1215 = vst [vmem:[#allocation2] sm:$0x3] %v1212
    // Predicated region
    $region130: #{_forward_impl.3} parent=1 // pred_check
      _
    $region131: #{_forward_impl.3} parent=1 // pred_check_branch
      %1217 = sbr.rel (0) target = $region133
    $region132: #{_forward_impl.3} parent=1 // pred_region
      %1219 = vsyncadd [#allocation3], 0
      %s1221 = sshll.u32 [#allocation2], 4
      %s1222 = int_to_ptr.vmem [resolvable:$true] %s1221
      %s1223 = sshll.u32 %s65, 4
      %s1224 = int_to_ptr.hbm [resolvable:$true] %s1223
      %1226 = dma.vmem_to_hbm [thread:$0]  %s1222, 32, %s1224, [#allocation3]
    $region133: #{_forward_impl.3} parent=1 // pred_fallthru
      _
    // Predicated region
    $region134: #{_forward_impl.3} parent=1 // pred_check
      _
    $region135: #{_forward_impl.3} parent=1 // pred_check_branch
      %1228 = sbr.rel (0) target = $region137
    $region136: #{_forward_impl.3} parent=1 // pred_region
      %1230 = dma.done [#allocation3], 32
    $region137: #{_forward_impl.3} parent=1 // pred_fallthru
      _
    %1231 = vsyncpa [#allocation3], 1

</llo_original>
